<compile_context>
chip_gen: v7x
topology: tpu7x:2x2x1
jax: 0.10.0
libtpu: 0.0.40
codegen_flags: <defaults>
</compile_context>

<pallas_src>
import functools

import jax
import jax.numpy as jnp
from jax.experimental import pallas as pl
from jax.experimental.pallas import tpu as pltpu

KSIZE = 7
PAD = 3


def _spatial_attention_kernel(x_ref, w_ref, b_ref, o_ref, *, H, W, C, NB):
    """x_ref/o_ref: (NB, C, H*W) VMEM; w_ref: (2*NB, 49) VMEM; b_ref: (1,) SMEM."""
    HW = H * W
    # Left/right zero extension: lane-aligned and >= 3*W + 3 (max |tap offset|).
    PADF = ((PAD * W + PAD + 127) // 128) * 128

    xv = x_ref[...]                                            # (NB, C, HW) native dtype

    # Channel descriptors: f32-accumulated mean, native max (no full f32 copy of x).
    avg = jnp.sum(xv, axis=1, dtype=jnp.float32) / float(C)    # (NB, HW) f32
    mx = jnp.max(xv, axis=1).astype(jnp.float32)               # (NB, HW) f32

    # Sublane-packed descriptor (rows [0:NB] = avg, [NB:2NB] = max), padded once.
    desc = jnp.concatenate([avg, mx], axis=0)                  # (2*NB, HW)
    zpad = jnp.zeros((2 * NB, PADF), jnp.float32)
    pd = jnp.concatenate([zpad, desc, zpad], axis=1)           # (2*NB, 2*PADF + HW)

    # Destination-column index of every flattened position (hoisted).
    col = jax.lax.broadcasted_iota(jnp.int32, (2 * NB, HW), 1) % W

    wv = w_ref[...]                                            # (2*NB, 49) f32

    acc = jnp.zeros((2 * NB, HW), jnp.float32)
    for kj in range(KSIZE):
        dj = kj - PAD
        part = jnp.zeros((2 * NB, HW), jnp.float32)
        for ki in range(KSIZE):
            off = PADF + (ki - PAD) * W + dj
            t = ki * KSIZE + kj
            # (2*NB, HW) tap slice * (2*NB, 1) weight column (lane broadcast).
            part = part + pd[:, off:off + HW] * wv[:, t:t + 1]
        if dj != 0:
            # Destination-side edge mask: a tap whose source column j+dj fell
            # outside [0, W) wrapped into a neighbouring row -> zero it. Row
            # over/under-flow lands in the zero pads, so no row mask is needed.
            keep = jnp.logical_and(col + dj >= 0, col + dj < W)
            part = jnp.where(keep, part, 0.0)
        acc = acc + part

    # Sublane sum of the two packed channels + bias, per batch.
    logit = acc[:NB, :] + acc[NB:, :] + b_ref[0]               # (NB, HW) f32
    gate = jax.nn.sigmoid(logit)[:, None, :]                   # (NB, 1, HW) f32

    # Gate applied in the input dtype; re-reading x_ref keeps its live range
    # out of the conv phase and the store lane-dense/unmasked.
    o_ref[...] = (x_ref[...] * gate.astype(o_ref.dtype)).astype(o_ref.dtype)


def _pick_batches_per_block(N, per_batch_bytes, target_bytes=2 << 20):
    """Largest divisor of N that keeps the block <= target and the grid >= 2 steps."""
    nb = 1
    for cand in range(2, N + 1):
        if N % cand:
            continue
        if cand * per_batch_bytes > target_bytes:
            break
        if N // cand < 2:          # keep >=2 grid steps for megacore / pipelining
            break
        nb = cand
    return nb


def spatial_attention(x, w, b):
    """x: (N, C, H, W); w: (1, 2, 7, 7); b: (1,).  Returns x * sigmoid(conv([avg,max]))."""
    N, C, H, W = x.shape
    HW = H * W
    itemsize = x.dtype.itemsize
    x_flat = x.reshape(N, C, HW)                       # contiguous: free relayout

    NB = _pick_batches_per_block(N, C * HW * itemsize)
    # TODO(synk): for very large single-batch blocks (C*HW*itemsize >> 2 MiB) add a
    # two-pass gate-compute / gate-apply split with C tiling instead of one block.

    # Sublane-packed conv weights: rows [0:NB] = avg-channel taps, [NB:2NB] = max.
    w_f32 = jnp.asarray(w, jnp.float32).reshape(2, KSIZE * KSIZE)
    w_packed = jnp.concatenate(
        [jnp.tile(w_f32[0:1], (NB, 1)), jnp.tile(w_f32[1:2], (NB, 1))], axis=0)
    b_arr = jnp.asarray(b, jnp.float32).reshape(1)

    block_bytes = NB * C * HW * itemsize
    # in + out blocks, double-buffered, plus slack for the f32 conv temporaries;
    # capped at 48 MiB so the same kernel stays safe on v7x's 64 MiB VMEM.
    vmem_limit = int(min(max(4 * block_bytes + (4 << 20), 16 << 20), 48 << 20))

    cost = pl.CostEstimate(
        flops=N * HW * (4 * KSIZE * KSIZE + 2 * C + 2),
        transcendentals=N * HW,
        bytes_accessed=2 * N * C * HW * itemsize + 2 * N * HW * 4,
    )

    kernel = functools.partial(_spatial_attention_kernel, H=H, W=W, C=C, NB=NB)
    out_flat = pl.pallas_call(
        kernel,
        grid=(N // NB,),
        out_shape=jax.ShapeDtypeStruct((N, C, HW), x.dtype),
        in_specs=[
            pl.BlockSpec((NB, C, HW), lambda n: (n, 0, 0)),            # x (pipelined)
            pl.BlockSpec((2 * NB, KSIZE * KSIZE), lambda n: (0, 0)),   # packed weights
            pl.BlockSpec(memory_space=pltpu.MemorySpace.SMEM),         # bias scalar
        ],
        out_specs=pl.BlockSpec((NB, C, HW), lambda n: (n, 0, 0)),
        compiler_params=pltpu.CompilerParams(
            dimension_semantics=("parallel",),
            vmem_limit_bytes=vmem_limit),
        cost_estimate=cost,
    )(x_flat, w_packed, b_arr)
    return out_flat.reshape(N, C, H, W)


def reference(x, w, b):
    """Pure-JAX reference mirroring the PyTorch forward (for validation)."""
    avg = jnp.mean(x, axis=1, keepdims=True)
    mx = jnp.max(x, axis=1, keepdims=True)
    feat = jnp.concatenate([avg, mx], axis=1)  # (N, 2, H, W)
    out = jax.lax.conv_general_dilated(
        feat, w, window_strides=(1, 1), padding=((PAD, PAD), (PAD, PAD)),
        dimension_numbers=("NCHW", "OIHW", "NCHW"),
        precision=jax.lax.Precision.HIGHEST)
    out = out + b.reshape(1, 1, 1, 1)
    return x * jax.nn.sigmoid(out)


if __name__ == "__main__":
    key = jax.random.PRNGKey(0)
    kx, kw, kb = jax.random.split(key, 3)

    N, C, H, W = 2, 4, 16, 16
    x = jax.random.normal(kx, (N, C, H, W), dtype=jnp.float32)
    # Synthetic conv1 parameters (shapes from nn.Conv2d(2, 1, 7, padding=3)).
    w = jax.random.normal(kw, (1, 2, KSIZE, KSIZE), dtype=jnp.float32) * 0.1
    b = jax.random.normal(kb, (1,), dtype=jnp.float32) * 0.1

    y = jax.block_until_ready(spatial_attention(x, w, b))

    y_ref = reference(x, w, b)
    assert y.shape == (N, C, H, W)
    assert jnp.allclose(y, y_ref, atol=1e-5, rtol=1e-5), "mismatch vs reference"

    print("KERNEL_OK")
</pallas_src>

<mosaic_0001>
module attributes {stable_mosaic.version = 11 : i64} {
  func.func @_spatial_attention_kernel(%arg0: i32, %arg1: memref<1x4x256xf32, #tpu.memory_space<vmem>>, %arg2: memref<2x49xf32, #tpu.memory_space<vmem>>, %arg3: memref<1xf32, #tpu.memory_space<smem>>, %arg4: memref<1x4x256xf32, #tpu.memory_space<vmem>>) attributes {dimension_semantics = [#tpu.dimension_semantics<parallel>], iteration_bounds = array<i64: 2>, scalar_prefetch = 0 : i64, scratch_operands = 0 : i64, tpu.core_type = #tpu.core_type<tc>, window_params = [{transform_indices = @transform_0, window_bounds = array<i64: 1, 4, 256>}, {pipeline_mode = #tpu.pipeline_mode<synchronous>, transform_indices = @transform_1, window_bounds = array<i64: 2, 49>}, {transform_indices = @transform_2, window_bounds = array<i64: 1>}, {transform_indices = @transform_3, window_bounds = array<i64: 1, 4, 256>}]} {
    %c0 = arith.constant 0 : index
    %c0_0 = arith.constant 0 : index
    %c0_1 = arith.constant 0 : index
    %0 = vector.load %arg1[%c0, %c0_0, %c0_1] : memref<1x4x256xf32, #tpu.memory_space<vmem>>, vector<1x4x256xf32>
    %cst = arith.constant dense<0.000000e+00> : vector<1x256xf32>
    %1 = vector.multi_reduction <add>, %0, %cst [1] : vector<1x4x256xf32> to vector<1x256xf32>
    %cst_2 = arith.constant 4.000000e+00 : f32
    %2 = vector.broadcast %cst_2 : f32 to vector<1x256xf32>
    %3 = arith.divf %1, %2 : vector<1x256xf32>
    %cst_3 = arith.constant dense<0xFF800000> : vector<1x256xf32>
    %4 = vector.multi_reduction <maximumf>, %0, %cst_3 [1] : vector<1x4x256xf32> to vector<1x256xf32>
    %5 = tpu.concatenate %3, %4 in 0 : vector<1x256xf32>, vector<1x256xf32> -> vector<2x256xf32>
    %cst_4 = arith.constant 0.000000e+00 : f32
    %6 = vector.broadcast %cst_4 : f32 to vector<2x128xf32>
    %7 = tpu.concatenate %6, %5, %6 in 1 : vector<2x128xf32>, vector<2x256xf32>, vector<2x128xf32> -> vector<2x512xf32>
    %8 = tpu.iota {dimensions = array<i32: 1>} : vector<2x256xi32>
    %c16_i32 = arith.constant 16 : i32
    %c0_i32 = arith.constant 0 : i32
    %9 = arith.cmpi eq, %c16_i32, %c0_i32 : i32
    %c1_i32 = arith.constant 1 : i32
    %10 = arith.select %9, %c1_i32, %c16_i32 : i32
    %11 = vector.broadcast %10 : i32 to vector<2x256xi32>
    %12 = arith.remsi %8, %11 : vector<2x256xi32>
    %c0_i32_5 = arith.constant 0 : i32
    %13 = vector.broadcast %c0_i32_5 : i32 to vector<2x256xi32>
    %14 = arith.cmpi ne, %12, %13 : vector<2x256xi32>
    %c0_i32_6 = arith.constant 0 : i32
    %15 = vector.broadcast %c0_i32_6 : i32 to vector<2x256xi32>
    %16 = arith.cmpi slt, %12, %15 : vector<2x256xi32>
    %c0_i32_7 = arith.constant 0 : i32
    %17 = arith.cmpi slt, %10, %c0_i32_7 : i32
    %18 = vector.broadcast %17 : i1 to vector<2x256xi1>
    %19 = vector.broadcast %18 : vector<2x256xi1> to vector<2x256xi1>
    %20 = arith.xori %16, %19 : vector<2x256xi1>
    %21 = arith.andi %20, %14 : vector<2x256xi1>
    %22 = vector.broadcast %10 : i32 to vector<2x256xi32>
    %23 = arith.addi %12, %22 : vector<2x256xi32>
    %24 = arith.select %21, %23, %12 : vector<2x256xi1>, vector<2x256xi32>
    %c0_8 = arith.constant 0 : index
    %c0_9 = arith.constant 0 : index
    %25 = vector.load %arg2[%c0_8, %c0_9] : memref<2x49xf32, #tpu.memory_space<vmem>>, vector<2x49xf32>
    %cst_10 = arith.constant 0.000000e+00 : f32
    %26 = vector.broadcast %cst_10 : f32 to vector<2x256xf32>
    %cst_11 = arith.constant 0.000000e+00 : f32
    %27 = vector.broadcast %cst_11 : f32 to vector<2x256xf32>
    %28 = vector.extract_strided_slice %7 {offsets = [0, 77], sizes = [2, 256], strides = [1, 1]} : vector<2x512xf32> to vector<2x256xf32>
    %29 = vector.extract_strided_slice %25 {offsets = [0, 0], sizes = [2, 1], strides = [1, 1]} : vector<2x49xf32> to vector<2x1xf32>
    %30 = vector.broadcast %29 : vector<2x1xf32> to vector<2x256xf32>
    %31 = arith.mulf %28, %30 : vector<2x256xf32>
    %32 = arith.addf %27, %31 : vector<2x256xf32>
    %33 = vector.extract_strided_slice %7 {offsets = [0, 93], sizes = [2, 256], strides = [1, 1]} : vector<2x512xf32> to vector<2x256xf32>
    %34 = vector.extract_strided_slice %25 {offsets = [0, 7], sizes = [2, 1], strides = [1, 1]} : vector<2x49xf32> to vector<2x1xf32>
    %35 = vector.broadcast %34 : vector<2x1xf32> to vector<2x256xf32>
    %36 = arith.mulf %33, %35 : vector<2x256xf32>
    %37 = arith.addf %32, %36 : vector<2x256xf32>
    %38 = vector.extract_strided_slice %7 {offsets = [0, 109], sizes = [2, 256], strides = [1, 1]} : vector<2x512xf32> to vector<2x256xf32>
    %39 = vector.extract_strided_slice %25 {offsets = [0, 14], sizes = [2, 1], strides = [1, 1]} : vector<2x49xf32> to vector<2x1xf32>
    %40 = vector.broadcast %39 : vector<2x1xf32> to vector<2x256xf32>
    %41 = arith.mulf %38, %40 : vector<2x256xf32>
    %42 = arith.addf %37, %41 : vector<2x256xf32>
    %43 = vector.extract_strided_slice %7 {offsets = [0, 125], sizes = [2, 256], strides = [1, 1]} : vector<2x512xf32> to vector<2x256xf32>
    %44 = vector.extract_strided_slice %25 {offsets = [0, 21], sizes = [2, 1], strides = [1, 1]} : vector<2x49xf32> to vector<2x1xf32>
    %45 = vector.broadcast %44 : vector<2x1xf32> to vector<2x256xf32>
    %46 = arith.mulf %43, %45 : vector<2x256xf32>
    %47 = arith.addf %42, %46 : vector<2x256xf32>
    %48 = vector.extract_strided_slice %7 {offsets = [0, 141], sizes = [2, 256], strides = [1, 1]} : vector<2x512xf32> to vector<2x256xf32>
    %49 = vector.extract_strided_slice %25 {offsets = [0, 28], sizes = [2, 1], strides = [1, 1]} : vector<2x49xf32> to vector<2x1xf32>
    %50 = vector.broadcast %49 : vector<2x1xf32> to vector<2x256xf32>
    %51 = arith.mulf %48, %50 : vector<2x256xf32>
    %52 = arith.addf %47, %51 : vector<2x256xf32>
    %53 = vector.extract_strided_slice %7 {offsets = [0, 157], sizes = [2, 256], strides = [1, 1]} : vector<2x512xf32> to vector<2x256xf32>
    %54 = vector.extract_strided_slice %25 {offsets = [0, 35], sizes = [2, 1], strides = [1, 1]} : vector<2x49xf32> to vector<2x1xf32>
    %55 = vector.broadcast %54 : vector<2x1xf32> to vector<2x256xf32>
    %56 = arith.mulf %53, %55 : vector<2x256xf32>
    %57 = arith.addf %52, %56 : vector<2x256xf32>
    %58 = vector.extract_strided_slice %7 {offsets = [0, 173], sizes = [2, 256], strides = [1, 1]} : vector<2x512xf32> to vector<2x256xf32>
    %59 = vector.extract_strided_slice %25 {offsets = [0, 42], sizes = [2, 1], strides = [1, 1]} : vector<2x49xf32> to vector<2x1xf32>
    %60 = vector.broadcast %59 : vector<2x1xf32> to vector<2x256xf32>
    %61 = arith.mulf %58, %60 : vector<2x256xf32>
    %62 = arith.addf %57, %61 : vector<2x256xf32>
    %c-3_i32 = arith.constant -3 : i32
    %63 = vector.broadcast %c-3_i32 : i32 to vector<2x256xi32>
    %64 = arith.addi %24, %63 : vector<2x256xi32>
    %c0_i32_12 = arith.constant 0 : i32
    %65 = vector.broadcast %c0_i32_12 : i32 to vector<2x256xi32>
    %66 = arith.cmpi sge, %64, %65 : vector<2x256xi32>
    %c-3_i32_13 = arith.constant -3 : i32
    %67 = vector.broadcast %c-3_i32_13 : i32 to vector<2x256xi32>
    %68 = arith.addi %24, %67 : vector<2x256xi32>
    %c16_i32_14 = arith.constant 16 : i32
    %69 = vector.broadcast %c16_i32_14 : i32 to vector<2x256xi32>
    %70 = arith.cmpi slt, %68, %69 : vector<2x256xi32>
    %71 = arith.andi %66, %70 : vector<2x256xi1>
    %cst_15 = arith.constant 0.000000e+00 : f32
    %72 = vector.broadcast %cst_15 : f32 to vector<2x256xf32>
    %73 = arith.select %71, %62, %72 : vector<2x256xi1>, vector<2x256xf32>
    %74 = arith.addf %26, %73 : vector<2x256xf32>
    %cst_16 = arith.constant 0.000000e+00 : f32
    %75 = vector.broadcast %cst_16 : f32 to vector<2x256xf32>
    %76 = vector.extract_strided_slice %7 {offsets = [0, 78], sizes = [2, 256], strides = [1, 1]} : vector<2x512xf32> to vector<2x256xf32>
    %77 = vector.extract_strided_slice %25 {offsets = [0, 1], sizes = [2, 1], strides = [1, 1]} : vector<2x49xf32> to vector<2x1xf32>
    %78 = vector.broadcast %77 : vector<2x1xf32> to vector<2x256xf32>
    %79 = arith.mulf %76, %78 : vector<2x256xf32>
    %80 = arith.addf %75, %79 : vector<2x256xf32>
    %81 = vector.extract_strided_slice %7 {offsets = [0, 94], sizes = [2, 256], strides = [1, 1]} : vector<2x512xf32> to vector<2x256xf32>
    %82 = vector.extract_strided_slice %25 {offsets = [0, 8], sizes = [2, 1], strides = [1, 1]} : vector<2x49xf32> to vector<2x1xf32>
    %83 = vector.broadcast %82 : vector<2x1xf32> to vector<2x256xf32>
    %84 = arith.mulf %81, %83 : vector<2x256xf32>
    %85 = arith.addf %80, %84 : vector<2x256xf32>
    %86 = vector.extract_strided_slice %7 {offsets = [0, 110], sizes = [2, 256], strides = [1, 1]} : vector<2x512xf32> to vector<2x256xf32>
    %87 = vector.extract_strided_slice %25 {offsets = [0, 15], sizes = [2, 1], strides = [1, 1]} : vector<2x49xf32> to vector<2x1xf32>
    %88 = vector.broadcast %87 : vector<2x1xf32> to vector<2x256xf32>
    %89 = arith.mulf %86, %88 : vector<2x256xf32>
    %90 = arith.addf %85, %89 : vector<2x256xf32>
    %91 = vector.extract_strided_slice %7 {offsets = [0, 126], sizes = [2, 256], strides = [1, 1]} : vector<2x512xf32> to vector<2x256xf32>
    %92 = vector.extract_strided_slice %25 {offsets = [0, 22], sizes = [2, 1], strides = [1, 1]} : vector<2x49xf32> to vector<2x1xf32>
    %93 = vector.broadcast %92 : vector<2x1xf32> to vector<2x256xf32>
    %94 = arith.mulf %91, %93 : vector<2x256xf32>
    %95 = arith.addf %90, %94 : vector<2x256xf32>
    %96 = vector.extract_strided_slice %7 {offsets = [0, 142], sizes = [2, 256], strides = [1, 1]} : vector<2x512xf32> to vector<2x256xf32>
    %97 = vector.extract_strided_slice %25 {offsets = [0, 29], sizes = [2, 1], strides = [1, 1]} : vector<2x49xf32> to vector<2x1xf32>
    %98 = vector.broadcast %97 : vector<2x1xf32> to vector<2x256xf32>
    %99 = arith.mulf %96, %98 : vector<2x256xf32>
    %100 = arith.addf %95, %99 : vector<2x256xf32>
    %101 = vector.extract_strided_slice %7 {offsets = [0, 158], sizes = [2, 256], strides = [1, 1]} : vector<2x512xf32> to vector<2x256xf32>
    %102 = vector.extract_strided_slice %25 {offsets = [0, 36], sizes = [2, 1], strides = [1, 1]} : vector<2x49xf32> to vector<2x1xf32>
    %103 = vector.broadcast %102 : vector<2x1xf32> to vector<2x256xf32>
    %104 = arith.mulf %101, %103 : vector<2x256xf32>
    %105 = arith.addf %100, %104 : vector<2x256xf32>
    %106 = vector.extract_strided_slice %7 {offsets = [0, 174], sizes = [2, 256], strides = [1, 1]} : vector<2x512xf32> to vector<2x256xf32>
    %107 = vector.extract_strided_slice %25 {offsets = [0, 43], sizes = [2, 1], strides = [1, 1]} : vector<2x49xf32> to vector<2x1xf32>
    %108 = vector.broadcast %107 : vector<2x1xf32> to vector<2x256xf32>
    %109 = arith.mulf %106, %108 : vector<2x256xf32>
    %110 = arith.addf %105, %109 : vector<2x256xf32>
    %c-2_i32 = arith.constant -2 : i32
    %111 = vector.broadcast %c-2_i32 : i32 to vector<2x256xi32>
    %112 = arith.addi %24, %111 : vector<2x256xi32>
    %c0_i32_17 = arith.constant 0 : i32
    %113 = vector.broadcast %c0_i32_17 : i32 to vector<2x256xi32>
    %114 = arith.cmpi sge, %112, %113 : vector<2x256xi32>
    %c-2_i32_18 = arith.constant -2 : i32
    %115 = vector.broadcast %c-2_i32_18 : i32 to vector<2x256xi32>
    %116 = arith.addi %24, %115 : vector<2x256xi32>
    %c16_i32_19 = arith.constant 16 : i32
    %117 = vector.broadcast %c16_i32_19 : i32 to vector<2x256xi32>
    %118 = arith.cmpi slt, %116, %117 : vector<2x256xi32>
    %119 = arith.andi %114, %118 : vector<2x256xi1>
    %cst_20 = arith.constant 0.000000e+00 : f32
    %120 = vector.broadcast %cst_20 : f32 to vector<2x256xf32>
    %121 = arith.select %119, %110, %120 : vector<2x256xi1>, vector<2x256xf32>
    %122 = arith.addf %74, %121 : vector<2x256xf32>
    %cst_21 = arith.constant 0.000000e+00 : f32
    %123 = vector.broadcast %cst_21 : f32 to vector<2x256xf32>
    %124 = vector.extract_strided_slice %7 {offsets = [0, 79], sizes = [2, 256], strides = [1, 1]} : vector<2x512xf32> to vector<2x256xf32>
    %125 = vector.extract_strided_slice %25 {offsets = [0, 2], sizes = [2, 1], strides = [1, 1]} : vector<2x49xf32> to vector<2x1xf32>
    %126 = vector.broadcast %125 : vector<2x1xf32> to vector<2x256xf32>
    %127 = arith.mulf %124, %126 : vector<2x256xf32>
    %128 = arith.addf %123, %127 : vector<2x256xf32>
    %129 = vector.extract_strided_slice %7 {offsets = [0, 95], sizes = [2, 256], strides = [1, 1]} : vector<2x512xf32> to vector<2x256xf32>
    %130 = vector.extract_strided_slice %25 {offsets = [0, 9], sizes = [2, 1], strides = [1, 1]} : vector<2x49xf32> to vector<2x1xf32>
    %131 = vector.broadcast %130 : vector<2x1xf32> to vector<2x256xf32>
    %132 = arith.mulf %129, %131 : vector<2x256xf32>
    %133 = arith.addf %128, %132 : vector<2x256xf32>
    %134 = vector.extract_strided_slice %7 {offsets = [0, 111], sizes = [2, 256], strides = [1, 1]} : vector<2x512xf32> to vector<2x256xf32>
    %135 = vector.extract_strided_slice %25 {offsets = [0, 16], sizes = [2, 1], strides = [1, 1]} : vector<2x49xf32> to vector<2x1xf32>
    %136 = vector.broadcast %135 : vector<2x1xf32> to vector<2x256xf32>
    %137 = arith.mulf %134, %136 : vector<2x256xf32>
    %138 = arith.addf %133, %137 : vector<2x256xf32>
    %139 = vector.extract_strided_slice %7 {offsets = [0, 127], sizes = [2, 256], strides = [1, 1]} : vector<2x512xf32> to vector<2x256xf32>
    %140 = vector.extract_strided_slice %25 {offsets = [0, 23], sizes = [2, 1], strides = [1, 1]} : vector<2x49xf32> to vector<2x1xf32>
    %141 = vector.broadcast %140 : vector<2x1xf32> to vector<2x256xf32>
    %142 = arith.mulf %139, %141 : vector<2x256xf32>
    %143 = arith.addf %138, %142 : vector<2x256xf32>
    %144 = vector.extract_strided_slice %7 {offsets = [0, 143], sizes = [2, 256], strides = [1, 1]} : vector<2x512xf32> to vector<2x256xf32>
    %145 = vector.extract_strided_slice %25 {offsets = [0, 30], sizes = [2, 1], strides = [1, 1]} : vector<2x49xf32> to vector<2x1xf32>
    %146 = vector.broadcast %145 : vector<2x1xf32> to vector<2x256xf32>
    %147 = arith.mulf %144, %146 : vector<2x256xf32>
    %148 = arith.addf %143, %147 : vector<2x256xf32>
    %149 = vector.extract_strided_slice %7 {offsets = [0, 159], sizes = [2, 256], strides = [1, 1]} : vector<2x512xf32> to vector<2x256xf32>
    %150 = vector.extract_strided_slice %25 {offsets = [0, 37], sizes = [2, 1], strides = [1, 1]} : vector<2x49xf32> to vector<2x1xf32>
    %151 = vector.broadcast %150 : vector<2x1xf32> to vector<2x256xf32>
    %152 = arith.mulf %149, %151 : vector<2x256xf32>
    %153 = arith.addf %148, %152 : vector<2x256xf32>
    %154 = vector.extract_strided_slice %7 {offsets = [0, 175], sizes = [2, 256], strides = [1, 1]} : vector<2x512xf32> to vector<2x256xf32>
    %155 = vector.extract_strided_slice %25 {offsets = [0, 44], sizes = [2, 1], strides = [1, 1]} : vector<2x49xf32> to vector<2x1xf32>
    %156 = vector.broadcast %155 : vector<2x1xf32> to vector<2x256xf32>
    %157 = arith.mulf %154, %156 : vector<2x256xf32>
    %158 = arith.addf %153, %157 : vector<2x256xf32>
    %c-1_i32 = arith.constant -1 : i32
    %159 = vector.broadcast %c-1_i32 : i32 to vector<2x256xi32>
    %160 = arith.addi %24, %159 : vector<2x256xi32>
    %c0_i32_22 = arith.constant 0 : i32
    %161 = vector.broadcast %c0_i32_22 : i32 to vector<2x256xi32>
    %162 = arith.cmpi sge, %160, %161 : vector<2x256xi32>
    %c-1_i32_23 = arith.constant -1 : i32
    %163 = vector.broadcast %c-1_i32_23 : i32 to vector<2x256xi32>
    %164 = arith.addi %24, %163 : vector<2x256xi32>
    %c16_i32_24 = arith.constant 16 : i32
    %165 = vector.broadcast %c16_i32_24 : i32 to vector<2x256xi32>
    %166 = arith.cmpi slt, %164, %165 : vector<2x256xi32>
    %167 = arith.andi %162, %166 : vector<2x256xi1>
    %cst_25 = arith.constant 0.000000e+00 : f32
    %168 = vector.broadcast %cst_25 : f32 to vector<2x256xf32>
    %169 = arith.select %167, %158, %168 : vector<2x256xi1>, vector<2x256xf32>
    %170 = arith.addf %122, %169 : vector<2x256xf32>
    %cst_26 = arith.constant 0.000000e+00 : f32
    %171 = vector.broadcast %cst_26 : f32 to vector<2x256xf32>
    %172 = vector.extract_strided_slice %7 {offsets = [0, 80], sizes = [2, 256], strides = [1, 1]} : vector<2x512xf32> to vector<2x256xf32>
    %173 = vector.extract_strided_slice %25 {offsets = [0, 3], sizes = [2, 1], strides = [1, 1]} : vector<2x49xf32> to vector<2x1xf32>
    %174 = vector.broadcast %173 : vector<2x1xf32> to vector<2x256xf32>
    %175 = arith.mulf %172, %174 : vector<2x256xf32>
    %176 = arith.addf %171, %175 : vector<2x256xf32>
    %177 = vector.extract_strided_slice %7 {offsets = [0, 96], sizes = [2, 256], strides = [1, 1]} : vector<2x512xf32> to vector<2x256xf32>
    %178 = vector.extract_strided_slice %25 {offsets = [0, 10], sizes = [2, 1], strides = [1, 1]} : vector<2x49xf32> to vector<2x1xf32>
    %179 = vector.broadcast %178 : vector<2x1xf32> to vector<2x256xf32>
    %180 = arith.mulf %177, %179 : vector<2x256xf32>
    %181 = arith.addf %176, %180 : vector<2x256xf32>
    %182 = vector.extract_strided_slice %7 {offsets = [0, 112], sizes = [2, 256], strides = [1, 1]} : vector<2x512xf32> to vector<2x256xf32>
    %183 = vector.extract_strided_slice %25 {offsets = [0, 17], sizes = [2, 1], strides = [1, 1]} : vector<2x49xf32> to vector<2x1xf32>
    %184 = vector.broadcast %183 : vector<2x1xf32> to vector<2x256xf32>
    %185 = arith.mulf %182, %184 : vector<2x256xf32>
    %186 = arith.addf %181, %185 : vector<2x256xf32>
    %187 = vector.extract_strided_slice %7 {offsets = [0, 128], sizes = [2, 256], strides = [1, 1]} : vector<2x512xf32> to vector<2x256xf32>
    %188 = vector.extract_strided_slice %25 {offsets = [0, 24], sizes = [2, 1], strides = [1, 1]} : vector<2x49xf32> to vector<2x1xf32>
    %189 = vector.broadcast %188 : vector<2x1xf32> to vector<2x256xf32>
    %190 = arith.mulf %187, %189 : vector<2x256xf32>
    %191 = arith.addf %186, %190 : vector<2x256xf32>
    %192 = vector.extract_strided_slice %7 {offsets = [0, 144], sizes = [2, 256], strides = [1, 1]} : vector<2x512xf32> to vector<2x256xf32>
    %193 = vector.extract_strided_slice %25 {offsets = [0, 31], sizes = [2, 1], strides = [1, 1]} : vector<2x49xf32> to vector<2x1xf32>
    %194 = vector.broadcast %193 : vector<2x1xf32> to vector<2x256xf32>
    %195 = arith.mulf %192, %194 : vector<2x256xf32>
    %196 = arith.addf %191, %195 : vector<2x256xf32>
    %197 = vector.extract_strided_slice %7 {offsets = [0, 160], sizes = [2, 256], strides = [1, 1]} : vector<2x512xf32> to vector<2x256xf32>
    %198 = vector.extract_strided_slice %25 {offsets = [0, 38], sizes = [2, 1], strides = [1, 1]} : vector<2x49xf32> to vector<2x1xf32>
    %199 = vector.broadcast %198 : vector<2x1xf32> to vector<2x256xf32>
    %200 = arith.mulf %197, %199 : vector<2x256xf32>
    %201 = arith.addf %196, %200 : vector<2x256xf32>
    %202 = vector.extract_strided_slice %7 {offsets = [0, 176], sizes = [2, 256], strides = [1, 1]} : vector<2x512xf32> to vector<2x256xf32>
    %203 = vector.extract_strided_slice %25 {offsets = [0, 45], sizes = [2, 1], strides = [1, 1]} : vector<2x49xf32> to vector<2x1xf32>
    %204 = vector.broadcast %203 : vector<2x1xf32> to vector<2x256xf32>
    %205 = arith.mulf %202, %204 : vector<2x256xf32>
    %206 = arith.addf %201, %205 : vector<2x256xf32>
    %207 = arith.addf %170, %206 : vector<2x256xf32>
    %cst_27 = arith.constant 0.000000e+00 : f32
    %208 = vector.broadcast %cst_27 : f32 to vector<2x256xf32>
    %209 = vector.extract_strided_slice %7 {offsets = [0, 81], sizes = [2, 256], strides = [1, 1]} : vector<2x512xf32> to vector<2x256xf32>
    %210 = vector.extract_strided_slice %25 {offsets = [0, 4], sizes = [2, 1], strides = [1, 1]} : vector<2x49xf32> to vector<2x1xf32>
    %211 = vector.broadcast %210 : vector<2x1xf32> to vector<2x256xf32>
    %212 = arith.mulf %209, %211 : vector<2x256xf32>
    %213 = arith.addf %208, %212 : vector<2x256xf32>
    %214 = vector.extract_strided_slice %7 {offsets = [0, 97], sizes = [2, 256], strides = [1, 1]} : vector<2x512xf32> to vector<2x256xf32>
    %215 = vector.extract_strided_slice %25 {offsets = [0, 11], sizes = [2, 1], strides = [1, 1]} : vector<2x49xf32> to vector<2x1xf32>
    %216 = vector.broadcast %215 : vector<2x1xf32> to vector<2x256xf32>
    %217 = arith.mulf %214, %216 : vector<2x256xf32>
    %218 = arith.addf %213, %217 : vector<2x256xf32>
    %219 = vector.extract_strided_slice %7 {offsets = [0, 113], sizes = [2, 256], strides = [1, 1]} : vector<2x512xf32> to vector<2x256xf32>
    %220 = vector.extract_strided_slice %25 {offsets = [0, 18], sizes = [2, 1], strides = [1, 1]} : vector<2x49xf32> to vector<2x1xf32>
    %221 = vector.broadcast %220 : vector<2x1xf32> to vector<2x256xf32>
    %222 = arith.mulf %219, %221 : vector<2x256xf32>
    %223 = arith.addf %218, %222 : vector<2x256xf32>
    %224 = vector.extract_strided_slice %7 {offsets = [0, 129], sizes = [2, 256], strides = [1, 1]} : vector<2x512xf32> to vector<2x256xf32>
    %225 = vector.extract_strided_slice %25 {offsets = [0, 25], sizes = [2, 1], strides = [1, 1]} : vector<2x49xf32> to vector<2x1xf32>
    %226 = vector.broadcast %225 : vector<2x1xf32> to vector<2x256xf32>
    %227 = arith.mulf %224, %226 : vector<2x256xf32>
    %228 = arith.addf %223, %227 : vector<2x256xf32>
    %229 = vector.extract_strided_slice %7 {offsets = [0, 145], sizes = [2, 256], strides = [1, 1]} : vector<2x512xf32> to vector<2x256xf32>
    %230 = vector.extract_strided_slice %25 {offsets = [0, 32], sizes = [2, 1], strides = [1, 1]} : vector<2x49xf32> to vector<2x1xf32>
    %231 = vector.broadcast %230 : vector<2x1xf32> to vector<2x256xf32>
    %232 = arith.mulf %229, %231 : vector<2x256xf32>
    %233 = arith.addf %228, %232 : vector<2x256xf32>
    %234 = vector.extract_strided_slice %7 {offsets = [0, 161], sizes = [2, 256], strides = [1, 1]} : vector<2x512xf32> to vector<2x256xf32>
    %235 = vector.extract_strided_slice %25 {offsets = [0, 39], sizes = [2, 1], strides = [1, 1]} : vector<2x49xf32> to vector<2x1xf32>
    %236 = vector.broadcast %235 : vector<2x1xf32> to vector<2x256xf32>
    %237 = arith.mulf %234, %236 : vector<2x256xf32>
    %238 = arith.addf %233, %237 : vector<2x256xf32>
    %239 = vector.extract_strided_slice %7 {offsets = [0, 177], sizes = [2, 256], strides = [1, 1]} : vector<2x512xf32> to vector<2x256xf32>
    %240 = vector.extract_strided_slice %25 {offsets = [0, 46], sizes = [2, 1], strides = [1, 1]} : vector<2x49xf32> to vector<2x1xf32>
    %241 = vector.broadcast %240 : vector<2x1xf32> to vector<2x256xf32>
    %242 = arith.mulf %239, %241 : vector<2x256xf32>
    %243 = arith.addf %238, %242 : vector<2x256xf32>
    %c1_i32_28 = arith.constant 1 : i32
    %244 = vector.broadcast %c1_i32_28 : i32 to vector<2x256xi32>
    %245 = arith.addi %24, %244 : vector<2x256xi32>
    %c0_i32_29 = arith.constant 0 : i32
    %246 = vector.broadcast %c0_i32_29 : i32 to vector<2x256xi32>
    %247 = arith.cmpi sge, %245, %246 : vector<2x256xi32>
    %c1_i32_30 = arith.constant 1 : i32
    %248 = vector.broadcast %c1_i32_30 : i32 to vector<2x256xi32>
    %249 = arith.addi %24, %248 : vector<2x256xi32>
    %c16_i32_31 = arith.constant 16 : i32
    %250 = vector.broadcast %c16_i32_31 : i32 to vector<2x256xi32>
    %251 = arith.cmpi slt, %249, %250 : vector<2x256xi32>
    %252 = arith.andi %247, %251 : vector<2x256xi1>
    %cst_32 = arith.constant 0.000000e+00 : f32
    %253 = vector.broadcast %cst_32 : f32 to vector<2x256xf32>
    %254 = arith.select %252, %243, %253 : vector<2x256xi1>, vector<2x256xf32>
    %255 = arith.addf %207, %254 : vector<2x256xf32>
    %cst_33 = arith.constant 0.000000e+00 : f32
    %256 = vector.broadcast %cst_33 : f32 to vector<2x256xf32>
    %257 = vector.extract_strided_slice %7 {offsets = [0, 82], sizes = [2, 256], strides = [1, 1]} : vector<2x512xf32> to vector<2x256xf32>
    %258 = vector.extract_strided_slice %25 {offsets = [0, 5], sizes = [2, 1], strides = [1, 1]} : vector<2x49xf32> to vector<2x1xf32>
    %259 = vector.broadcast %258 : vector<2x1xf32> to vector<2x256xf32>
    %260 = arith.mulf %257, %259 : vector<2x256xf32>
    %261 = arith.addf %256, %260 : vector<2x256xf32>
    %262 = vector.extract_strided_slice %7 {offsets = [0, 98], sizes = [2, 256], strides = [1, 1]} : vector<2x512xf32> to vector<2x256xf32>
    %263 = vector.extract_strided_slice %25 {offsets = [0, 12], sizes = [2, 1], strides = [1, 1]} : vector<2x49xf32> to vector<2x1xf32>
    %264 = vector.broadcast %263 : vector<2x1xf32> to vector<2x256xf32>
    %265 = arith.mulf %262, %264 : vector<2x256xf32>
    %266 = arith.addf %261, %265 : vector<2x256xf32>
    %267 = vector.extract_strided_slice %7 {offsets = [0, 114], sizes = [2, 256], strides = [1, 1]} : vector<2x512xf32> to vector<2x256xf32>
    %268 = vector.extract_strided_slice %25 {offsets = [0, 19], sizes = [2, 1], strides = [1, 1]} : vector<2x49xf32> to vector<2x1xf32>
    %269 = vector.broadcast %268 : vector<2x1xf32> to vector<2x256xf32>
    %270 = arith.mulf %267, %269 : vector<2x256xf32>
    %271 = arith.addf %266, %270 : vector<2x256xf32>
    %272 = vector.extract_strided_slice %7 {offsets = [0, 130], sizes = [2, 256], strides = [1, 1]} : vector<2x512xf32> to vector<2x256xf32>
    %273 = vector.extract_strided_slice %25 {offsets = [0, 26], sizes = [2, 1], strides = [1, 1]} : vector<2x49xf32> to vector<2x1xf32>
    %274 = vector.broadcast %273 : vector<2x1xf32> to vector<2x256xf32>
    %275 = arith.mulf %272, %274 : vector<2x256xf32>
    %276 = arith.addf %271, %275 : vector<2x256xf32>
    %277 = vector.extract_strided_slice %7 {offsets = [0, 146], sizes = [2, 256], strides = [1, 1]} : vector<2x512xf32> to vector<2x256xf32>
    %278 = vector.extract_strided_slice %25 {offsets = [0, 33], sizes = [2, 1], strides = [1, 1]} : vector<2x49xf32> to vector<2x1xf32>
    %279 = vector.broadcast %278 : vector<2x1xf32> to vector<2x256xf32>
    %280 = arith.mulf %277, %279 : vector<2x256xf32>
    %281 = arith.addf %276, %280 : vector<2x256xf32>
    %282 = vector.extract_strided_slice %7 {offsets = [0, 162], sizes = [2, 256], strides = [1, 1]} : vector<2x512xf32> to vector<2x256xf32>
    %283 = vector.extract_strided_slice %25 {offsets = [0, 40], sizes = [2, 1], strides = [1, 1]} : vector<2x49xf32> to vector<2x1xf32>
    %284 = vector.broadcast %283 : vector<2x1xf32> to vector<2x256xf32>
    %285 = arith.mulf %282, %284 : vector<2x256xf32>
    %286 = arith.addf %281, %285 : vector<2x256xf32>
    %287 = vector.extract_strided_slice %7 {offsets = [0, 178], sizes = [2, 256], strides = [1, 1]} : vector<2x512xf32> to vector<2x256xf32>
    %288 = vector.extract_strided_slice %25 {offsets = [0, 47], sizes = [2, 1], strides = [1, 1]} : vector<2x49xf32> to vector<2x1xf32>
    %289 = vector.broadcast %288 : vector<2x1xf32> to vector<2x256xf32>
    %290 = arith.mulf %287, %289 : vector<2x256xf32>
    %291 = arith.addf %286, %290 : vector<2x256xf32>
    %c2_i32 = arith.constant 2 : i32
    %292 = vector.broadcast %c2_i32 : i32 to vector<2x256xi32>
    %293 = arith.addi %24, %292 : vector<2x256xi32>
    %c0_i32_34 = arith.constant 0 : i32
    %294 = vector.broadcast %c0_i32_34 : i32 to vector<2x256xi32>
    %295 = arith.cmpi sge, %293, %294 : vector<2x256xi32>
    %c2_i32_35 = arith.constant 2 : i32
    %296 = vector.broadcast %c2_i32_35 : i32 to vector<2x256xi32>
    %297 = arith.addi %24, %296 : vector<2x256xi32>
    %c16_i32_36 = arith.constant 16 : i32
    %298 = vector.broadcast %c16_i32_36 : i32 to vector<2x256xi32>
    %299 = arith.cmpi slt, %297, %298 : vector<2x256xi32>
    %300 = arith.andi %295, %299 : vector<2x256xi1>
    %cst_37 = arith.constant 0.000000e+00 : f32
    %301 = vector.broadcast %cst_37 : f32 to vector<2x256xf32>
    %302 = arith.select %300, %291, %301 : vector<2x256xi1>, vector<2x256xf32>
    %303 = arith.addf %255, %302 : vector<2x256xf32>
    %cst_38 = arith.constant 0.000000e+00 : f32
    %304 = vector.broadcast %cst_38 : f32 to vector<2x256xf32>
    %305 = vector.extract_strided_slice %7 {offsets = [0, 83], sizes = [2, 256], strides = [1, 1]} : vector<2x512xf32> to vector<2x256xf32>
    %306 = vector.extract_strided_slice %25 {offsets = [0, 6], sizes = [2, 1], strides = [1, 1]} : vector<2x49xf32> to vector<2x1xf32>
    %307 = vector.broadcast %306 : vector<2x1xf32> to vector<2x256xf32>
    %308 = arith.mulf %305, %307 : vector<2x256xf32>
    %309 = arith.addf %304, %308 : vector<2x256xf32>
    %310 = vector.extract_strided_slice %7 {offsets = [0, 99], sizes = [2, 256], strides = [1, 1]} : vector<2x512xf32> to vector<2x256xf32>
    %311 = vector.extract_strided_slice %25 {offsets = [0, 13], sizes = [2, 1], strides = [1, 1]} : vector<2x49xf32> to vector<2x1xf32>
    %312 = vector.broadcast %311 : vector<2x1xf32> to vector<2x256xf32>
    %313 = arith.mulf %310, %312 : vector<2x256xf32>
    %314 = arith.addf %309, %313 : vector<2x256xf32>
    %315 = vector.extract_strided_slice %7 {offsets = [0, 115], sizes = [2, 256], strides = [1, 1]} : vector<2x512xf32> to vector<2x256xf32>
    %316 = vector.extract_strided_slice %25 {offsets = [0, 20], sizes = [2, 1], strides = [1, 1]} : vector<2x49xf32> to vector<2x1xf32>
    %317 = vector.broadcast %316 : vector<2x1xf32> to vector<2x256xf32>
    %318 = arith.mulf %315, %317 : vector<2x256xf32>
    %319 = arith.addf %314, %318 : vector<2x256xf32>
    %320 = vector.extract_strided_slice %7 {offsets = [0, 131], sizes = [2, 256], strides = [1, 1]} : vector<2x512xf32> to vector<2x256xf32>
    %321 = vector.extract_strided_slice %25 {offsets = [0, 27], sizes = [2, 1], strides = [1, 1]} : vector<2x49xf32> to vector<2x1xf32>
    %322 = vector.broadcast %321 : vector<2x1xf32> to vector<2x256xf32>
    %323 = arith.mulf %320, %322 : vector<2x256xf32>
    %324 = arith.addf %319, %323 : vector<2x256xf32>
    %325 = vector.extract_strided_slice %7 {offsets = [0, 147], sizes = [2, 256], strides = [1, 1]} : vector<2x512xf32> to vector<2x256xf32>
    %326 = vector.extract_strided_slice %25 {offsets = [0, 34], sizes = [2, 1], strides = [1, 1]} : vector<2x49xf32> to vector<2x1xf32>
    %327 = vector.broadcast %326 : vector<2x1xf32> to vector<2x256xf32>
    %328 = arith.mulf %325, %327 : vector<2x256xf32>
    %329 = arith.addf %324, %328 : vector<2x256xf32>
    %330 = vector.extract_strided_slice %7 {offsets = [0, 163], sizes = [2, 256], strides = [1, 1]} : vector<2x512xf32> to vector<2x256xf32>
    %331 = vector.extract_strided_slice %25 {offsets = [0, 41], sizes = [2, 1], strides = [1, 1]} : vector<2x49xf32> to vector<2x1xf32>
    %332 = vector.broadcast %331 : vector<2x1xf32> to vector<2x256xf32>
    %333 = arith.mulf %330, %332 : vector<2x256xf32>
    %334 = arith.addf %329, %333 : vector<2x256xf32>
    %335 = vector.extract_strided_slice %7 {offsets = [0, 179], sizes = [2, 256], strides = [1, 1]} : vector<2x512xf32> to vector<2x256xf32>
    %336 = vector.extract_strided_slice %25 {offsets = [0, 48], sizes = [2, 1], strides = [1, 1]} : vector<2x49xf32> to vector<2x1xf32>
    %337 = vector.broadcast %336 : vector<2x1xf32> to vector<2x256xf32>
    %338 = arith.mulf %335, %337 : vector<2x256xf32>
    %339 = arith.addf %334, %338 : vector<2x256xf32>
    %c3_i32 = arith.constant 3 : i32
    %340 = vector.broadcast %c3_i32 : i32 to vector<2x256xi32>
    %341 = arith.addi %24, %340 : vector<2x256xi32>
    %c0_i32_39 = arith.constant 0 : i32
    %342 = vector.broadcast %c0_i32_39 : i32 to vector<2x256xi32>
    %343 = arith.cmpi sge, %341, %342 : vector<2x256xi32>
    %c3_i32_40 = arith.constant 3 : i32
    %344 = vector.broadcast %c3_i32_40 : i32 to vector<2x256xi32>
    %345 = arith.addi %24, %344 : vector<2x256xi32>
    %c16_i32_41 = arith.constant 16 : i32
    %346 = vector.broadcast %c16_i32_41 : i32 to vector<2x256xi32>
    %347 = arith.cmpi slt, %345, %346 : vector<2x256xi32>
    %348 = arith.andi %343, %347 : vector<2x256xi1>
    %cst_42 = arith.constant 0.000000e+00 : f32
    %349 = vector.broadcast %cst_42 : f32 to vector<2x256xf32>
    %350 = arith.select %348, %339, %349 : vector<2x256xi1>, vector<2x256xf32>
    %351 = arith.addf %303, %350 : vector<2x256xf32>
    %352 = vector.extract_strided_slice %351 {offsets = [0, 0], sizes = [1, 256], strides = [1, 1]} : vector<2x256xf32> to vector<1x256xf32>
    %353 = vector.extract_strided_slice %351 {offsets = [1, 0], sizes = [1, 256], strides = [1, 1]} : vector<2x256xf32> to vector<1x256xf32>
    %354 = arith.addf %352, %353 : vector<1x256xf32>
    %c0_43 = arith.constant 0 : index
    %355 = memref.load %arg3[%c0_43] : memref<1xf32, #tpu.memory_space<smem>>
    %356 = vector.broadcast %355 : f32 to vector<1x256xf32>
    %357 = arith.addf %354, %356 : vector<1x256xf32>
    %358 = arith.negf %357 : vector<1x256xf32>
    %359 = math.exp %358 : vector<1x256xf32>
    %cst_44 = arith.constant 1.000000e+00 : f32
    %360 = vector.broadcast %cst_44 : f32 to vector<1x256xf32>
    %361 = arith.addf %360, %359 : vector<1x256xf32>
    %362 = arith.divf %360, %361 : vector<1x256xf32>
    %363 = vector.shape_cast %362 : vector<1x256xf32> to vector<1x1x256xf32>
    %c0_45 = arith.constant 0 : index
    %c0_46 = arith.constant 0 : index
    %c0_47 = arith.constant 0 : index
    %364 = vector.load %arg1[%c0_45, %c0_46, %c0_47] : memref<1x4x256xf32, #tpu.memory_space<vmem>>, vector<1x4x256xf32>
    %365 = vector.broadcast %363 : vector<1x1x256xf32> to vector<1x4x256xf32>
    %366 = arith.mulf %364, %365 : vector<1x4x256xf32>
    %c0_48 = arith.constant 0 : index
    %c0_49 = arith.constant 0 : index
    %c0_50 = arith.constant 0 : index
    %367 = vector.load %arg4[%c0_48, %c0_49, %c0_50] : memref<1x4x256xf32, #tpu.memory_space<vmem>>, vector<1x4x256xf32>
    tpu.vector_store %arg4[%c0_48, %c0_49, %c0_50], %366 {strides = array<i32>} : memref<1x4x256xf32, #tpu.memory_space<vmem>>, vector<1x4x256xf32>,
    return
  }
  func.func @transform_0(%arg0: i32) -> (i32, i32, i32) {
    %c0_i32 = arith.constant 0 : i32
    %c0_i32_0 = arith.constant 0 : i32
    %c0_i32_1 = arith.constant 0 : i32
    return %arg0, %c0_i32, %c0_i32_0 : i32, i32, i32
  }
  func.func @transform_1(%arg0: i32) -> (i32, i32) {
    %c0_i32 = arith.constant 0 : i32
    %c0_i32_0 = arith.constant 0 : i32
    %c0_i32_1 = arith.constant 0 : i32
    return %c0_i32, %c0_i32_0 : i32, i32
  }
  func.func @transform_2(%arg0: i32) -> i32 {
    %c0_i32 = arith.constant 0 : i32
    %c0_i32_0 = arith.constant 0 : i32
    return %c0_i32 : i32
  }
  func.func @transform_3(%arg0: i32) -> (i32, i32, i32) {
    %c0_i32 = arith.constant 0 : i32
    %c0_i32_0 = arith.constant 0 : i32
    %c0_i32_1 = arith.constant 0 : i32
    return %arg0, %c0_i32, %c0_i32_0 : i32, i32, i32
  }
}

</mosaic_0001>

<llo_original>
// kernel: tpu_custom_call.1
$region0: #{tpu_custom_call.1}
  #allocation0 [shape = 'u32[]', space=smem, size = 0x4, offset = 0x4, fixed_abs, tag = 'smem constant byte address 0x4 - core index']
  #allocation1 [shape = 'u32[144,128]{1,0:T(1,128)}', space=vmem, size = 0x12000, scoped, tag = 'internal scratch']
  #allocation2 [shape = 'f32[1]{0:T(128)S(6)}', space=smem, size = 0x200, scoped, tag = 'scoped memory for tpu_custom_call.1']
  %s0 = inlined_call_operand.hbm [shape: f32[2,4,256], index: 0, kind: input, shape index: {}]
  %s1 = inlined_call_operand.vmem [shape: f32[2,49], index: 1, kind: input, shape index: {}]
  %s2 = inlined_call_operand.<no memory space> [shape: f32[1], index: 2, kind: input, shape index: {}]
  %s3 = inlined_call_operand.hbm [shape: f32[2,4,256], index: 3, kind: output, shape index: {}]
  %s4 = sld [smem:[#allocation0]]
  $region49: #{tpu_custom_call.1} parent=0
    _
  %s6 = ssub.s32 1, %s4
  %s7 = scalar_select 0, %s6, %s4
  %8 = sst [smem:[#allocation2]] %s2
  $region1: #{tpu_custom_call.1} parent=0
    #allocation3 [shape = 'u8[8192]{0}', space=vmem, size = 0x2000, scoped, tag = 'input window, operand 0']
    #allocation4 [shape = 's32[2]{0}', space=sflag, size = 0x8, scoped, tag = 'scoped memory for tpu_custom_call.1']
    #allocation5 [shape = 's32[2]{0}', space=sflag, size = 0x8, scoped, tag = 'scoped memory for tpu_custom_call.1']
    #allocation6 [shape = 'u8[8192]{0}', space=vmem, size = 0x2000, scoped, tag = 'output window, operand 0']
    %9 = vsyncpa [#allocation4], 0
    %s10 = scalar_lea.sflag [#allocation4], 1
    %11 = vsyncpa %s10, 0
    %12 = vsyncpa [#allocation5], 0
    %s13 = scalar_lea.sflag [#allocation5], 1
    %14 = vsyncpa %s13, 0
    loop: start=0, step=1, limit=4
    $region2: #{tpu_custom_call.1} parent=1 // loop_pre_header
      _
    $region3: #{tpu_custom_call.1} parent=1 // loop_header
      %s16 = sphi 0, %s20
      %p17 = scmp.ge.s32.totalorder %s16, 4
      %s26 = sphi 0, %s28
      %s29 = sphi 0, %s26
      %s30 = sphi 0, %s29
      %s46 = sphi 0, %s30
      %s50 = sphi 0, %s50
      %s52 = sphi 0, %s50
      %s53 = sphi 0, %s52
      %s67 = sphi 0, %s53
      %s71 = sphi 0, %s71
      %s73 = sphi 0, %s71
      %s74 = sphi 0, %s73
      %s88 = sphi 0, %s74
      %s94 = sphi 0, %s96
      %s97 = sphi 0, %s94
      %s98 = sphi 0, %s97
      %s114 = sphi 0, %s98
    $region4: #{tpu_custom_call.1} parent=1 // loop_header_branch
      %19 = sbr.rel (%p17) target = $region8
    $region5: #{tpu_custom_call.1} parent=1 // loop_body
      %s21 = ssub.s32 %s16, 1
      %s22 = ssub.s32 %s16, 2
      %s23 = sadd.s32 %s16, 1
      %s24 = ssub.s32 %s16, %s23
      %p25 = scmp.eq.s32.totalorder %s24, 0
      %s27 = sadd.s32 %s26, 1
      %s28 = scalar_select %p25, %s26, %s27
      %p31 = pneg %p25
      %p32 = scmp.eq.s32.totalorder %s16, 1
      %p33 = por %p31, %p32
      %p34 = scmp.ne.s32.totalorder %s26, %s29
      %p35 = scmp.eq.s32.totalorder %s16, 0
      %p36 = por %p34, %p35
      %p37 = scmp.ne.s32.totalorder %s26, %s29
      %p38 = scmp.eq.s32.totalorder %s21, 1
      %p39 = por %p37, %p38
      %p40 = scmp.ne.s32.totalorder %s29, %s30
      %p41 = scmp.eq.s32.totalorder %s21, 0
      %p42 = por %p40, %p41
      %p43 = scmp.ne.s32.totalorder %s29, %s30
      %p44 = scmp.eq.s32.totalorder %s22, 1
      %p45 = por %p43, %p44
      %p47 = scmp.ne.s32.totalorder %s30, %s46
      %p48 = scmp.eq.s32.totalorder %s22, 0
      %p49 = por %p47, %p48
      %s51 = sadd.s32 %s50, 1
      %p54 = scmp.eq.s32.totalorder %s16, 1
      %p55 = scmp.ne.s32.totalorder %s50, %s52
      %p56 = scmp.eq.s32.totalorder %s16, 0
      %p57 = por %p55, %p56
      %p58 = scmp.ne.s32.totalorder %s50, %s52
      %p59 = scmp.eq.s32.totalorder %s21, 1
      %p60 = por %p58, %p59
      %p61 = scmp.ne.s32.totalorder %s52, %s53
      %p62 = scmp.eq.s32.totalorder %s21, 0
      %p63 = por %p61, %p62
      %p64 = scmp.ne.s32.totalorder %s52, %s53
      %p65 = scmp.eq.s32.totalorder %s22, 1
      %p66 = por %p64, %p65
      %p68 = scmp.ne.s32.totalorder %s53, %s67
      %p69 = scmp.eq.s32.totalorder %s22, 0
      %p70 = por %p68, %p69
      %s72 = sadd.s32 %s71, 1
      %p75 = scmp.eq.s32.totalorder %s16, 1
      %p76 = scmp.ne.s32.totalorder %s71, %s73
      %p77 = scmp.eq.s32.totalorder %s16, 0
      %p78 = por %p76, %p77
      %p79 = scmp.ne.s32.totalorder %s71, %s73
      %p80 = scmp.eq.s32.totalorder %s21, 1
      %p81 = por %p79, %p80
      %p82 = scmp.ne.s32.totalorder %s73, %s74
      %p83 = scmp.eq.s32.totalorder %s21, 0
      %p84 = por %p82, %p83
      %p85 = scmp.ne.s32.totalorder %s73, %s74
      %p86 = scmp.eq.s32.totalorder %s22, 1
      %p87 = por %p85, %p86
      %p89 = scmp.ne.s32.totalorder %s74, %s88
      %p90 = scmp.eq.s32.totalorder %s22, 0
      %p91 = por %p89, %p90
      %s92 = ssub.s32 %s16, %s23
      %p93 = scmp.eq.s32.totalorder %s92, 0
      %s95 = sadd.s32 %s94, 1
      %s96 = scalar_select %p93, %s94, %s95
      %p99 = pneg %p93
      %p100 = scmp.eq.s32.totalorder %s16, 1
      %p101 = por %p99, %p100
      %p102 = scmp.ne.s32.totalorder %s94, %s97
      %p103 = scmp.eq.s32.totalorder %s16, 0
      %p104 = por %p102, %p103
      %p105 = scmp.ne.s32.totalorder %s94, %s97
      %p106 = scmp.eq.s32.totalorder %s21, 1
      %p107 = por %p105, %p106
      %p108 = scmp.ne.s32.totalorder %s97, %s98
      %p109 = scmp.eq.s32.totalorder %s21, 0
      %p110 = por %p108, %p109
      %p111 = scmp.ne.s32.totalorder %s97, %s98
      %p112 = scmp.eq.s32.totalorder %s22, 1
      %p113 = por %p111, %p112
      %p115 = scmp.ne.s32.totalorder %s98, %s114
      %p116 = scmp.eq.s32.totalorder %s22, 0
      %p117 = por %p115, %p116
      %p118 = scmp.le.s32.totalorder 1, %s16
      %p119 = scmp.lt.s32.totalorder %s16, 3
      %p120 = pnand %p118, %p119
      %p121 = pneg %p120
      // Predicated region
      $region9: #{tpu_custom_call.1} parent=5 // pred_check
        _
      $region10: #{tpu_custom_call.1} parent=5 // pred_check_branch
        %123 = sbr.rel (%p120) target = $region12
      $region11: #{tpu_custom_call.1} parent=5 // pred_region
        %s124 = ssub.s32 %s16, 1
        // Predicated region
        $region13: #{tpu_custom_call.1} parent=11 // pred_check
          %p125 = pneg %p63
        $region14: #{tpu_custom_call.1} parent=11 // pred_check_branch
          %127 = sbr.rel (%p125) target = $region16
        $region15: #{tpu_custom_call.1} parent=11 // pred_region
          _
        $region16: #{tpu_custom_call.1} parent=11 // pred_fallthru
          _
        // Predicated region
        $region17: #{tpu_custom_call.1} parent=11 // pred_check
          %p128 = pneg %p84
        $region18: #{tpu_custom_call.1} parent=11 // pred_check_branch
          %130 = sbr.rel (%p128) target = $region20
        $region19: #{tpu_custom_call.1} parent=11 // pred_region
          _
        $region20: #{tpu_custom_call.1} parent=11 // pred_fallthru
          _
      $region12: #{tpu_custom_call.1} parent=5 // pred_fallthru
        _
      %p131 = scmp.lt.s32.totalorder %s16, 2
      // Predicated region
      $region21: #{tpu_custom_call.1} parent=5 // pred_check
        %p132 = pneg %p131
      $region22: #{tpu_custom_call.1} parent=5 // pred_check_branch
        %134 = sbr.rel (%p132) target = $region24
      $region23: #{tpu_custom_call.1} parent=5 // pred_region
        // Predicated region
        $region25: #{tpu_custom_call.1} parent=23 // pred_check
          %p135 = pneg %p36
        $region26: #{tpu_custom_call.1} parent=23 // pred_check_branch
          %137 = sbr.rel (%p135) target = $region28
        $region27: #{tpu_custom_call.1} parent=23 // pred_region
          %s138 = sand.u32 %s26, 1
          %s139 = scalar_lea.sflag [#allocation4], %s138
          %s140 = sand.u32 %s26, 1
          %s141 = smul.addr %s140, 8
          %s142 = scalar_lea.vmem [#allocation3], %s141
          %s144 = ssub.s32 128, 128
          %145 = vsyncadd %s139, %s144
          %s146 = smul.addr %s16, 2
          %s147 = smul.addr %s146, 64
          %s148 = scalar_lea.hbm %s0, %s147
          %s150 = sshll.u32 %s142, 4
          %s151 = int_to_ptr.vmem [resolvable:$true] %s150
          %153 = dma.hbm_to_vmem [thread:$0]  %s148, 128, %s151, %s139
        $region28: #{tpu_custom_call.1} parent=23 // pred_fallthru
          _
      $region24: #{tpu_custom_call.1} parent=5 // pred_fallthru
        _
      %p154 = scmp.le.s32.totalorder 1, %s16
      %p155 = scmp.lt.s32.totalorder %s16, 3
      %p156 = pnand %p154, %p155
      %p157 = pneg %p156
      // Predicated region
      $region29: #{tpu_custom_call.1} parent=5 // pred_check
        _
      $region30: #{tpu_custom_call.1} parent=5 // pred_check_branch
        %159 = sbr.rel (%p156) target = $region32
      $region31: #{tpu_custom_call.1} parent=5 // pred_region
        %s160 = ssub.s32 %s16, 1
        %s161 = sand.u32 %s29, 1
        %s162 = scalar_lea.sflag [#allocation4], %s161
        %s163 = sand.u32 %s29, 1
        %s164 = smul.addr %s163, 8
        %s165 = scalar_lea.vmem [#allocation3], %s164
        // Predicated region
        $region33: #{tpu_custom_call.1} parent=31 // pred_check
          %p166 = pneg %p42
        $region34: #{tpu_custom_call.1} parent=31 // pred_check_branch
          %168 = sbr.rel (%p166) target = $region36
        $region35: #{tpu_custom_call.1} parent=31 // pred_region
          %169 = dma.done %s162, 128
        $region36: #{tpu_custom_call.1} parent=31 // pred_fallthru
          _
        %s170 = sand.u32 %s29, 1
        %s171 = scalar_lea.sflag [#allocation4], %s170
        %s172 = sand.u32 %s29, 1
        %s173 = smul.addr %s172, 8
        %s174 = scalar_lea.vmem [#allocation3], %s173
        %p175 = pneg %p42
        %p176 = pneg %p39
        %p177 = pneg %p63
        %p178 = pneg %p60
        %p179 = pneg %p84
        %p180 = pneg %p81
        %p181 = pneg %p110
        %p182 = pneg %p107
        %s183 = sand.u32 %s97, 1
        %s184 = scalar_lea.sflag [#allocation5], %s183
        %s185 = sand.u32 %s97, 1
        %s186 = smul.addr %s185, 8
        %s187 = scalar_lea.vmem [#allocation6], %s186
        %v188 = vld [vmem:[%s165] sm:$0xff]
        %v190 = vcombine.high %v188, %v188
        %vm192 = vcmask 1043456
        %v193 = vsel %vm192, %v188, 0.0
        %v194 = vrot.slane %v193, 4
        %v195 = vadd.f32 %v193, %v194
        %v196 = vrot.slane %v195, 2
        %v197 = vadd.f32 %v195, %v196
        %v198 = vrot.slane %v197, 1
        %v199 = vadd.f32 %v197, %v198
        %v200 = vsel %vm192, %v190, 0.0
        %v201 = vrot.slane %v200, 4
        %v202 = vadd.f32 %v200, %v201
        %v203 = vrot.slane %v202, 2
        %v204 = vadd.f32 %v202, %v203
        %v205 = vrot.slane %v204, 1
        %v206 = vadd.f32 %v204, %v205
        %v207 = vrcp.pop 4.0
        %v208 = vmul.f32 %v199, %v207
        %v209 = vmul.f32 %v206, %v207
        %v210 = vsel %vm192, %v188, -inf
        %v211 = vrot.slane %v210, 4
        %v212 = vmax.f32 %v210, %v211
        %v213 = vrot.slane %v212, 2
        %v214 = vmax.f32 %v212, %v213
        %v215 = vrot.slane %v214, 1
        %v216 = vmax.f32 %v214, %v215
        %v217 = vsel %vm192, %v190, -inf
        %v218 = vrot.slane %v217, 4
        %v219 = vmax.f32 %v217, %v218
        %v220 = vrot.slane %v219, 2
        %v221 = vmax.f32 %v219, %v220
        %v222 = vrot.slane %v221, 1
        %v223 = vmax.f32 %v221, %v222
        %vm224 = vcmask 1040384
        %v225 = vsel %vm224, %v208, %v216
        %v226 = vsel %vm224, %v209, %v223
        %v227 = vlaneseq
        %v228 = vand.u32 %v227, 127
        %v229 = vadd.s32 %v228, 128
        %vm230 = vcmp.lt.s32.totalorder %v228, 0
        %v231 = vsub.s32 0, %v228
        %v232 = vsel %vm230, %v231, %v228
        %v233 = vshrl.u32 %v232, 4
        %v234 = vand.u32 %v232, 15
        %v235 = vsub.s32 0, %v234
        %v236 = vsel %vm230, %v235, %v234
        %vm237 = vcmp.lt.s32.totalorder %v229, 0
        %v238 = vsub.s32 0, %v229
        %v239 = vsel %vm237, %v238, %v229
        %v240 = vshrl.u32 %v239, 4
        %v241 = vand.u32 %v239, 15
        %v242 = vsub.s32 0, %v241
        %v243 = vsel %vm237, %v242, %v241
        %vm244 = vcmp.ne.s32.totalorder %v236, 0
        %vm245 = vcmp.ne.s32.totalorder %v243, 0
        %vm246 = vcmp.lt.s32.totalorder %v236, 0
        %vm247 = vcmp.lt.s32.totalorder %v243, 0
        %vm248 = vmand %vm246, %vm244
        %vm249 = vmand %vm247, %vm245
        %v250 = vadd.s32 %v236, 16
        %v251 = vadd.s32 %v243, 16
        %v252 = vsel %vm248, %v250, %v236
        %v253 = vsel %vm249, %v251, %v243
        %v254 = vld [vmem:[%s1] sm:$0x3]
        %256 = vset.pattern.permute.xlu0 0
        %257 = vperm.xlu0 %256, %v254
        %v258 = vpop.permute.xlu0 %257
        %v260 = vmul.f32 %v258, 0.0
        %v261 = vmul.f32 %v225, %v258
        %v262 = vmul.f32 %v226, %v258
        %v263 = vadd.f32 %v260, 0.0
        %v264 = vadd.f32 %v261, 0.0
        %v265 = vadd.f32 %v262, 0.0
        %266 = vset.pattern.permute.xlu0 7
        %267 = vperm.xlu0 %266, %v254
        %v268 = vpop.permute.xlu0 %267
        %v270 = vmul.f32 %v268, 0.0
        %v271 = vmul.f32 %v225, %v268
        %v272 = vmul.f32 %v226, %v268
        %276 = vrot.lane.b32.xlu0 %v270, 112
        %v277 = vpop.permute.xlu0 %276
        %278 = vrot.lane.b32.xlu0 %v271, 112
        %v279 = vpop.permute.xlu0 %278
        %280 = vrot.lane.b32.xlu0 %v272, 112
        %v281 = vpop.permute.xlu0 %280
        %vm282 = vcmask 916480
        %v283 = vsel %vm282, %v277, %v279
        %v284 = vsel %vm282, %v279, %v281
        %v288 = vadd.f32 %v263, %v283
        %v289 = vadd.f32 %v264, %v284
        %v290 = vadd.f32 %v265, %v281
        %291 = vset.pattern.permute.xlu0 14
        %292 = vperm.xlu0 %291, %v254
        %v293 = vpop.permute.xlu0 %292
        %v295 = vmul.f32 %v293, 0.0
        %v296 = vmul.f32 %v225, %v293
        %v297 = vmul.f32 %v226, %v293
        %301 = vrot.lane.b32.xlu0 %v295, 96
        %v302 = vpop.permute.xlu0 %301
        %303 = vrot.lane.b32.xlu0 %v296, 96
        %v304 = vpop.permute.xlu0 %303
        %305 = vrot.lane.b32.xlu0 %v297, 96
        %v306 = vpop.permute.xlu0 %305
        %vm307 = vcmask 785408
        %v308 = vsel %vm307, %v302, %v304
        %v309 = vsel %vm307, %v304, %v306
        %v313 = vadd.f32 %v288, %v308
        %v314 = vadd.f32 %v289, %v309
        %v315 = vadd.f32 %v290, %v306
        %316 = vset.pattern.permute.xlu0 21
        %317 = vperm.xlu0 %316, %v254
        %v318 = vpop.permute.xlu0 %317
        %v320 = vmul.f32 %v318, 0.0
        %v321 = vmul.f32 %v225, %v318
        %v322 = vmul.f32 %v226, %v318
        %326 = vrot.lane.b32.xlu0 %v320, 80
        %v327 = vpop.permute.xlu0 %326
        %328 = vrot.lane.b32.xlu0 %v321, 80
        %v329 = vpop.permute.xlu0 %328
        %330 = vrot.lane.b32.xlu0 %v322, 80
        %v331 = vpop.permute.xlu0 %330
        %vm332 = vcmask 654336
        %v333 = vsel %vm332, %v327, %v329
        %v334 = vsel %vm332, %v329, %v331
        %v338 = vadd.f32 %v313, %v333
        %v339 = vadd.f32 %v314, %v334
        %v340 = vadd.f32 %v315, %v331
        %341 = vset.pattern.permute.xlu0 28
        %342 = vperm.xlu0 %341, %v254
        %v343 = vpop.permute.xlu0 %342
        %v345 = vmul.f32 %v225, %v343
        %v346 = vmul.f32 %v226, %v343
        %v347 = vmul.f32 %v343, 0.0
        %351 = vrot.lane.b32.xlu0 %v345, 64
        %v352 = vpop.permute.xlu0 %351
        %353 = vrot.lane.b32.xlu0 %v346, 64
        %v354 = vpop.permute.xlu0 %353
        %355 = vrot.lane.b32.xlu0 %v347, 64
        %v356 = vpop.permute.xlu0 %355
        %vm357 = vcmask 523264
        %v358 = vsel %vm357, %v352, %v354
        %v359 = vsel %vm357, %v354, %v356
        %v363 = vadd.f32 %v338, %v352
        %v364 = vadd.f32 %v339, %v358
        %v365 = vadd.f32 %v340, %v359
        %366 = vset.pattern.permute.xlu0 35
        %367 = vperm.xlu0 %366, %v254
        %v368 = vpop.permute.xlu0 %367
        %v370 = vmul.f32 %v225, %v368
        %v371 = vmul.f32 %v226, %v368
        %v372 = vmul.f32 %v368, 0.0
        %376 = vrot.lane.b32.xlu0 %v370, 48
        %v377 = vpop.permute.xlu0 %376
        %378 = vrot.lane.b32.xlu0 %v371, 48
        %v379 = vpop.permute.xlu0 %378
        %380 = vrot.lane.b32.xlu0 %v372, 48
        %v381 = vpop.permute.xlu0 %380
        %vm382 = vcmask 392192
        %v383 = vsel %vm382, %v377, %v379
        %v384 = vsel %vm382, %v379, %v381
        %v388 = vadd.f32 %v363, %v377
        %v389 = vadd.f32 %v364, %v383
        %v390 = vadd.f32 %v365, %v384
        %391 = vset.pattern.permute.xlu0 42
        %392 = vperm.xlu0 %391, %v254
        %v393 = vpop.permute.xlu0 %392
        %v395 = vmul.f32 %v225, %v393
        %v396 = vmul.f32 %v226, %v393
        %v397 = vmul.f32 %v393, 0.0
        %401 = vrot.lane.b32.xlu0 %v395, 32
        %v402 = vpop.permute.xlu0 %401
        %403 = vrot.lane.b32.xlu0 %v396, 32
        %v404 = vpop.permute.xlu0 %403
        %405 = vrot.lane.b32.xlu0 %v397, 32
        %v406 = vpop.permute.xlu0 %405
        %vm407 = vcmask 261120
        %v408 = vsel %vm407, %v402, %v404
        %v409 = vsel %vm407, %v404, %v406
        %v413 = vadd.f32 %v388, %v402
        %v414 = vadd.f32 %v389, %v408
        %v415 = vadd.f32 %v390, %v409
        %v416 = vadd.s32 %v252, 4294967293
        %v417 = vadd.s32 %v253, 4294967293
        %vm418 = vcmp.ge.s32.totalorder %v416, 0
        %vm419 = vcmp.ge.s32.totalorder %v417, 0
        %vm420 = vcmp.lt.s32.totalorder %v416, 16
        %vm421 = vcmp.lt.s32.totalorder %v417, 16
        %vm422 = vmand %vm418, %vm420
        %vm423 = vmand %vm419, %vm421
        %427 = vrot.lane.b32.xlu0 %v413, 51
        %v428 = vpop.permute.xlu0 %427
        %429 = vrot.lane.b32.xlu0 %v414, 51
        %v430 = vpop.permute.xlu0 %429
        %431 = vrot.lane.b32.xlu0 %v415, 51
        %v432 = vpop.permute.xlu0 %431
        %vm433 = vcmask 416768
        %v434 = vsel %vm433, %v428, %v430
        %v435 = vsel %vm433, %v430, %v432
        %v438 = vsel %vm422, %v434, 0.0
        %v439 = vsel %vm423, %v435, 0.0
        %v440 = vadd.f32 %v438, 0.0
        %v441 = vadd.f32 %v439, 0.0
        %442 = vset.pattern.permute.xlu0 1
        %443 = vperm.xlu0 %442, %v254
        %v444 = vpop.permute.xlu0 %443
        %v446 = vmul.f32 %v444, 0.0
        %v447 = vmul.f32 %v225, %v444
        %v448 = vmul.f32 %v226, %v444
        %v449 = vadd.f32 %v446, 0.0
        %v450 = vadd.f32 %v447, 0.0
        %v451 = vadd.f32 %v448, 0.0
        %452 = vset.pattern.permute.xlu0 8
        %453 = vperm.xlu0 %452, %v254
        %v454 = vpop.permute.xlu0 %453
        %v456 = vmul.f32 %v454, 0.0
        %v457 = vmul.f32 %v225, %v454
        %v458 = vmul.f32 %v226, %v454
        %462 = vrot.lane.b32.xlu0 %v456, 112
        %v463 = vpop.permute.xlu0 %462
        %464 = vrot.lane.b32.xlu0 %v457, 112
        %v465 = vpop.permute.xlu0 %464
        %466 = vrot.lane.b32.xlu0 %v458, 112
        %v467 = vpop.permute.xlu0 %466
        %v468 = vsel %vm282, %v463, %v465
        %v469 = vsel %vm282, %v465, %v467
        %v473 = vadd.f32 %v449, %v468
        %v474 = vadd.f32 %v450, %v469
        %v475 = vadd.f32 %v451, %v467
        %476 = vset.pattern.permute.xlu0 15
        %477 = vperm.xlu0 %476, %v254
        %v478 = vpop.permute.xlu0 %477
        %v480 = vmul.f32 %v478, 0.0
        %v481 = vmul.f32 %v225, %v478
        %v482 = vmul.f32 %v226, %v478
        %486 = vrot.lane.b32.xlu0 %v480, 96
        %v487 = vpop.permute.xlu0 %486
        %488 = vrot.lane.b32.xlu0 %v481, 96
        %v489 = vpop.permute.xlu0 %488
        %490 = vrot.lane.b32.xlu0 %v482, 96
        %v491 = vpop.permute.xlu0 %490
        %v492 = vsel %vm307, %v487, %v489
        %v493 = vsel %vm307, %v489, %v491
        %v497 = vadd.f32 %v473, %v492
        %v498 = vadd.f32 %v474, %v493
        %v499 = vadd.f32 %v475, %v491
        %500 = vset.pattern.permute.xlu0 22
        %501 = vperm.xlu0 %500, %v254
        %v502 = vpop.permute.xlu0 %501
        %v504 = vmul.f32 %v502, 0.0
        %v505 = vmul.f32 %v225, %v502
        %v506 = vmul.f32 %v226, %v502
        %510 = vrot.lane.b32.xlu0 %v504, 80
        %v511 = vpop.permute.xlu0 %510
        %512 = vrot.lane.b32.xlu0 %v505, 80
        %v513 = vpop.permute.xlu0 %512
        %514 = vrot.lane.b32.xlu0 %v506, 80
        %v515 = vpop.permute.xlu0 %514
        %v516 = vsel %vm332, %v511, %v513
        %v517 = vsel %vm332, %v513, %v515
        %v521 = vadd.f32 %v497, %v516
        %v522 = vadd.f32 %v498, %v517
        %v523 = vadd.f32 %v499, %v515
        %524 = vset.pattern.permute.xlu0 29
        %525 = vperm.xlu0 %524, %v254
        %v526 = vpop.permute.xlu0 %525
        %v528 = vmul.f32 %v225, %v526
        %v529 = vmul.f32 %v226, %v526
        %v530 = vmul.f32 %v526, 0.0
        %534 = vrot.lane.b32.xlu0 %v528, 64
        %v535 = vpop.permute.xlu0 %534
        %536 = vrot.lane.b32.xlu0 %v529, 64
        %v537 = vpop.permute.xlu0 %536
        %538 = vrot.lane.b32.xlu0 %v530, 64
        %v539 = vpop.permute.xlu0 %538
        %v540 = vsel %vm357, %v535, %v537
        %v541 = vsel %vm357, %v537, %v539
        %v545 = vadd.f32 %v521, %v535
        %v546 = vadd.f32 %v522, %v540
        %v547 = vadd.f32 %v523, %v541
        %548 = vset.pattern.permute.xlu0 36
        %549 = vperm.xlu0 %548, %v254
        %v550 = vpop.permute.xlu0 %549
        %v552 = vmul.f32 %v225, %v550
        %v553 = vmul.f32 %v226, %v550
        %v554 = vmul.f32 %v550, 0.0
        %558 = vrot.lane.b32.xlu0 %v552, 48
        %v559 = vpop.permute.xlu0 %558
        %560 = vrot.lane.b32.xlu0 %v553, 48
        %v561 = vpop.permute.xlu0 %560
        %562 = vrot.lane.b32.xlu0 %v554, 48
        %v563 = vpop.permute.xlu0 %562
        %v564 = vsel %vm382, %v559, %v561
        %v565 = vsel %vm382, %v561, %v563
        %v569 = vadd.f32 %v545, %v559
        %v570 = vadd.f32 %v546, %v564
        %v571 = vadd.f32 %v547, %v565
        %572 = vset.pattern.permute.xlu0 43
        %573 = vperm.xlu0 %572, %v254
        %v574 = vpop.permute.xlu0 %573
        %v576 = vmul.f32 %v225, %v574
        %v577 = vmul.f32 %v226, %v574
        %v578 = vmul.f32 %v574, 0.0
        %582 = vrot.lane.b32.xlu0 %v576, 32
        %v583 = vpop.permute.xlu0 %582
        %584 = vrot.lane.b32.xlu0 %v577, 32
        %v585 = vpop.permute.xlu0 %584
        %586 = vrot.lane.b32.xlu0 %v578, 32
        %v587 = vpop.permute.xlu0 %586
        %v588 = vsel %vm407, %v583, %v585
        %v589 = vsel %vm407, %v585, %v587
        %v593 = vadd.f32 %v569, %v583
        %v594 = vadd.f32 %v570, %v588
        %v595 = vadd.f32 %v571, %v589
        %v596 = vadd.s32 %v252, 4294967294
        %v597 = vadd.s32 %v253, 4294967294
        %vm598 = vcmp.ge.s32.totalorder %v596, 0
        %vm599 = vcmp.ge.s32.totalorder %v597, 0
        %vm600 = vcmp.lt.s32.totalorder %v596, 16
        %vm601 = vcmp.lt.s32.totalorder %v597, 16
        %vm602 = vmand %vm598, %vm600
        %vm603 = vmand %vm599, %vm601
        %607 = vrot.lane.b32.xlu0 %v593, 50
        %v608 = vpop.permute.xlu0 %607
        %609 = vrot.lane.b32.xlu0 %v594, 50
        %v610 = vpop.permute.xlu0 %609
        %611 = vrot.lane.b32.xlu0 %v595, 50
        %v612 = vpop.permute.xlu0 %611
        %vm613 = vcmask 408576
        %v614 = vsel %vm613, %v608, %v610
        %v615 = vsel %vm613, %v610, %v612
        %v618 = vsel %vm602, %v614, 0.0
        %v619 = vsel %vm603, %v615, 0.0
        %v620 = vadd.f32 %v440, %v618
        %v621 = vadd.f32 %v441, %v619
        %622 = vset.pattern.permute.xlu0 2
        %623 = vperm.xlu0 %622, %v254
        %v624 = vpop.permute.xlu0 %623
        %v626 = vmul.f32 %v624, 0.0
        %v627 = vmul.f32 %v225, %v624
        %v628 = vmul.f32 %v226, %v624
        %v629 = vadd.f32 %v626, 0.0
        %v630 = vadd.f32 %v627, 0.0
        %v631 = vadd.f32 %v628, 0.0
        %632 = vset.pattern.permute.xlu0 9
        %633 = vperm.xlu0 %632, %v254
        %v634 = vpop.permute.xlu0 %633
        %v636 = vmul.f32 %v634, 0.0
        %v637 = vmul.f32 %v225, %v634
        %v638 = vmul.f32 %v226, %v634
        %642 = vrot.lane.b32.xlu0 %v636, 112
        %v643 = vpop.permute.xlu0 %642
        %644 = vrot.lane.b32.xlu0 %v637, 112
        %v645 = vpop.permute.xlu0 %644
        %646 = vrot.lane.b32.xlu0 %v638, 112
        %v647 = vpop.permute.xlu0 %646
        %v648 = vsel %vm282, %v643, %v645
        %v649 = vsel %vm282, %v645, %v647
        %v653 = vadd.f32 %v629, %v648
        %v654 = vadd.f32 %v630, %v649
        %v655 = vadd.f32 %v631, %v647
        %656 = vset.pattern.permute.xlu0 16
        %657 = vperm.xlu0 %656, %v254
        %v658 = vpop.permute.xlu0 %657
        %v660 = vmul.f32 %v658, 0.0
        %v661 = vmul.f32 %v225, %v658
        %v662 = vmul.f32 %v226, %v658
        %666 = vrot.lane.b32.xlu0 %v660, 96
        %v667 = vpop.permute.xlu0 %666
        %668 = vrot.lane.b32.xlu0 %v661, 96
        %v669 = vpop.permute.xlu0 %668
        %670 = vrot.lane.b32.xlu0 %v662, 96
        %v671 = vpop.permute.xlu0 %670
        %v672 = vsel %vm307, %v667, %v669
        %v673 = vsel %vm307, %v669, %v671
        %v677 = vadd.f32 %v653, %v672
        %v678 = vadd.f32 %v654, %v673
        %v679 = vadd.f32 %v655, %v671
        %680 = vset.pattern.permute.xlu0 23
        %681 = vperm.xlu0 %680, %v254
        %v682 = vpop.permute.xlu0 %681
        %v684 = vmul.f32 %v682, 0.0
        %v685 = vmul.f32 %v225, %v682
        %v686 = vmul.f32 %v226, %v682
        %690 = vrot.lane.b32.xlu0 %v684, 80
        %v691 = vpop.permute.xlu0 %690
        %692 = vrot.lane.b32.xlu0 %v685, 80
        %v693 = vpop.permute.xlu0 %692
        %694 = vrot.lane.b32.xlu0 %v686, 80
        %v695 = vpop.permute.xlu0 %694
        %v696 = vsel %vm332, %v691, %v693
        %v697 = vsel %vm332, %v693, %v695
        %v701 = vadd.f32 %v677, %v696
        %v702 = vadd.f32 %v678, %v697
        %v703 = vadd.f32 %v679, %v695
        %704 = vset.pattern.permute.xlu0 30
        %705 = vperm.xlu0 %704, %v254
        %v706 = vpop.permute.xlu0 %705
        %v708 = vmul.f32 %v225, %v706
        %v709 = vmul.f32 %v226, %v706
        %v710 = vmul.f32 %v706, 0.0
        %714 = vrot.lane.b32.xlu0 %v708, 64
        %v715 = vpop.permute.xlu0 %714
        %716 = vrot.lane.b32.xlu0 %v709, 64
        %v717 = vpop.permute.xlu0 %716
        %718 = vrot.lane.b32.xlu0 %v710, 64
        %v719 = vpop.permute.xlu0 %718
        %v720 = vsel %vm357, %v715, %v717
        %v721 = vsel %vm357, %v717, %v719
        %v725 = vadd.f32 %v701, %v715
        %v726 = vadd.f32 %v702, %v720
        %v727 = vadd.f32 %v703, %v721
        %728 = vset.pattern.permute.xlu0 37
        %729 = vperm.xlu0 %728, %v254
        %v730 = vpop.permute.xlu0 %729
        %v732 = vmul.f32 %v225, %v730
        %v733 = vmul.f32 %v226, %v730
        %v734 = vmul.f32 %v730, 0.0
        %738 = vrot.lane.b32.xlu0 %v732, 48
        %v739 = vpop.permute.xlu0 %738
        %740 = vrot.lane.b32.xlu0 %v733, 48
        %v741 = vpop.permute.xlu0 %740
        %742 = vrot.lane.b32.xlu0 %v734, 48
        %v743 = vpop.permute.xlu0 %742
        %v744 = vsel %vm382, %v739, %v741
        %v745 = vsel %vm382, %v741, %v743
        %v749 = vadd.f32 %v725, %v739
        %v750 = vadd.f32 %v726, %v744
        %v751 = vadd.f32 %v727, %v745
        %752 = vset.pattern.permute.xlu0 44
        %753 = vperm.xlu0 %752, %v254
        %v754 = vpop.permute.xlu0 %753
        %v756 = vmul.f32 %v225, %v754
        %v757 = vmul.f32 %v226, %v754
        %v758 = vmul.f32 %v754, 0.0
        %762 = vrot.lane.b32.xlu0 %v756, 32
        %v763 = vpop.permute.xlu0 %762
        %764 = vrot.lane.b32.xlu0 %v757, 32
        %v765 = vpop.permute.xlu0 %764
        %766 = vrot.lane.b32.xlu0 %v758, 32
        %v767 = vpop.permute.xlu0 %766
        %v768 = vsel %vm407, %v763, %v765
        %v769 = vsel %vm407, %v765, %v767
        %v773 = vadd.f32 %v749, %v763
        %v774 = vadd.f32 %v750, %v768
        %v775 = vadd.f32 %v751, %v769
        %v776 = vadd.s32 %v252, 4294967295
        %v777 = vadd.s32 %v253, 4294967295
        %vm778 = vcmp.ge.s32.totalorder %v776, 0
        %vm779 = vcmp.ge.s32.totalorder %v777, 0
        %vm780 = vcmp.lt.s32.totalorder %v776, 16
        %vm781 = vcmp.lt.s32.totalorder %v777, 16
        %vm782 = vmand %vm778, %vm780
        %vm783 = vmand %vm779, %vm781
        %787 = vrot.lane.b32.xlu0 %v773, 49
        %v788 = vpop.permute.xlu0 %787
        %789 = vrot.lane.b32.xlu0 %v774, 49
        %v790 = vpop.permute.xlu0 %789
        %791 = vrot.lane.b32.xlu0 %v775, 49
        %v792 = vpop.permute.xlu0 %791
        %vm793 = vcmask 400384
        %v794 = vsel %vm793, %v788, %v790
        %v795 = vsel %vm793, %v790, %v792
        %v798 = vsel %vm782, %v794, 0.0
        %v799 = vsel %vm783, %v795, 0.0
        %v800 = vadd.f32 %v620, %v798
        %v801 = vadd.f32 %v621, %v799
        %802 = vset.pattern.permute.xlu0 3
        %803 = vperm.xlu0 %802, %v254
        %v804 = vpop.permute.xlu0 %803
        %v806 = vmul.f32 %v804, 0.0
        %v807 = vmul.f32 %v225, %v804
        %v808 = vmul.f32 %v226, %v804
        %v809 = vadd.f32 %v806, 0.0
        %v810 = vadd.f32 %v807, 0.0
        %v811 = vadd.f32 %v808, 0.0
        %812 = vset.pattern.permute.xlu0 10
        %813 = vperm.xlu0 %812, %v254
        %v814 = vpop.permute.xlu0 %813
        %v816 = vmul.f32 %v814, 0.0
        %v817 = vmul.f32 %v225, %v814
        %v818 = vmul.f32 %v226, %v814
        %822 = vrot.lane.b32.xlu0 %v816, 112
        %v823 = vpop.permute.xlu0 %822
        %824 = vrot.lane.b32.xlu0 %v817, 112
        %v825 = vpop.permute.xlu0 %824
        %826 = vrot.lane.b32.xlu0 %v818, 112
        %v827 = vpop.permute.xlu0 %826
        %v828 = vsel %vm282, %v823, %v825
        %v829 = vsel %vm282, %v825, %v827
        %v833 = vadd.f32 %v809, %v828
        %v834 = vadd.f32 %v810, %v829
        %v835 = vadd.f32 %v811, %v827
        %836 = vset.pattern.permute.xlu0 17
        %837 = vperm.xlu0 %836, %v254
        %v838 = vpop.permute.xlu0 %837
        %v840 = vmul.f32 %v838, 0.0
        %v841 = vmul.f32 %v225, %v838
        %v842 = vmul.f32 %v226, %v838
        %846 = vrot.lane.b32.xlu0 %v840, 96
        %v847 = vpop.permute.xlu0 %846
        %848 = vrot.lane.b32.xlu0 %v841, 96
        %v849 = vpop.permute.xlu0 %848
        %850 = vrot.lane.b32.xlu0 %v842, 96
        %v851 = vpop.permute.xlu0 %850
        %v852 = vsel %vm307, %v847, %v849
        %v853 = vsel %vm307, %v849, %v851
        %v857 = vadd.f32 %v833, %v852
        %v858 = vadd.f32 %v834, %v853
        %v859 = vadd.f32 %v835, %v851
        %860 = vset.pattern.permute.xlu0 24
        %861 = vperm.xlu0 %860, %v254
        %v862 = vpop.permute.xlu0 %861
        %v864 = vmul.f32 %v225, %v862
        %v865 = vmul.f32 %v226, %v862
        %868 = vrot.lane.b32.xlu0 %v864, 80
        %v869 = vpop.permute.xlu0 %868
        %870 = vrot.lane.b32.xlu0 %v865, 80
        %v871 = vpop.permute.xlu0 %870
        %v872 = vsel %vm332, %v869, %v871
        %v876 = vadd.f32 %v857, %v869
        %v877 = vadd.f32 %v858, %v872
        %v878 = vadd.f32 %v859, %v871
        %879 = vset.pattern.permute.xlu0 31
        %880 = vperm.xlu0 %879, %v254
        %v881 = vpop.permute.xlu0 %880
        %v883 = vmul.f32 %v225, %v881
        %v884 = vmul.f32 %v226, %v881
        %v885 = vmul.f32 %v881, 0.0
        %889 = vrot.lane.b32.xlu0 %v883, 64
        %v890 = vpop.permute.xlu0 %889
        %891 = vrot.lane.b32.xlu0 %v884, 64
        %v892 = vpop.permute.xlu0 %891
        %893 = vrot.lane.b32.xlu0 %v885, 64
        %v894 = vpop.permute.xlu0 %893
        %v895 = vsel %vm357, %v890, %v892
        %v896 = vsel %vm357, %v892, %v894
        %v900 = vadd.f32 %v876, %v890
        %v901 = vadd.f32 %v877, %v895
        %v902 = vadd.f32 %v878, %v896
        %903 = vset.pattern.permute.xlu0 38
        %904 = vperm.xlu0 %903, %v254
        %v905 = vpop.permute.xlu0 %904
        %v907 = vmul.f32 %v225, %v905
        %v908 = vmul.f32 %v226, %v905
        %v909 = vmul.f32 %v905, 0.0
        %913 = vrot.lane.b32.xlu0 %v907, 48
        %v914 = vpop.permute.xlu0 %913
        %915 = vrot.lane.b32.xlu0 %v908, 48
        %v916 = vpop.permute.xlu0 %915
        %917 = vrot.lane.b32.xlu0 %v909, 48
        %v918 = vpop.permute.xlu0 %917
        %v919 = vsel %vm382, %v914, %v916
        %v920 = vsel %vm382, %v916, %v918
        %v924 = vadd.f32 %v900, %v914
        %v925 = vadd.f32 %v901, %v919
        %v926 = vadd.f32 %v902, %v920
        %927 = vset.pattern.permute.xlu0 45
        %928 = vperm.xlu0 %927, %v254
        %v929 = vpop.permute.xlu0 %928
        %v931 = vmul.f32 %v225, %v929
        %v932 = vmul.f32 %v226, %v929
        %v933 = vmul.f32 %v929, 0.0
        %937 = vrot.lane.b32.xlu0 %v931, 32
        %v938 = vpop.permute.xlu0 %937
        %939 = vrot.lane.b32.xlu0 %v932, 32
        %v940 = vpop.permute.xlu0 %939
        %941 = vrot.lane.b32.xlu0 %v933, 32
        %v942 = vpop.permute.xlu0 %941
        %v943 = vsel %vm407, %v938, %v940
        %v944 = vsel %vm407, %v940, %v942
        %v948 = vadd.f32 %v924, %v938
        %v949 = vadd.f32 %v925, %v943
        %v950 = vadd.f32 %v926, %v944
        %954 = vrot.lane.b32.xlu0 %v948, 48
        %v955 = vpop.permute.xlu0 %954
        %956 = vrot.lane.b32.xlu0 %v949, 48
        %v957 = vpop.permute.xlu0 %956
        %958 = vrot.lane.b32.xlu0 %v950, 48
        %v959 = vpop.permute.xlu0 %958
        %v960 = vsel %vm382, %v955, %v957
        %v961 = vsel %vm382, %v957, %v959
        %v964 = vadd.f32 %v800, %v960
        %v965 = vadd.f32 %v801, %v961
        %966 = vset.pattern.permute.xlu0 4
        %967 = vperm.xlu0 %966, %v254
        %v968 = vpop.permute.xlu0 %967
        %v970 = vmul.f32 %v968, 0.0
        %v971 = vmul.f32 %v225, %v968
        %v972 = vmul.f32 %v226, %v968
        %v973 = vadd.f32 %v970, 0.0
        %v974 = vadd.f32 %v971, 0.0
        %v975 = vadd.f32 %v972, 0.0
        %976 = vset.pattern.permute.xlu0 11
        %977 = vperm.xlu0 %976, %v254
        %v978 = vpop.permute.xlu0 %977
        %v980 = vmul.f32 %v978, 0.0
        %v981 = vmul.f32 %v225, %v978
        %v982 = vmul.f32 %v226, %v978
        %986 = vrot.lane.b32.xlu0 %v980, 112
        %v987 = vpop.permute.xlu0 %986
        %988 = vrot.lane.b32.xlu0 %v981, 112
        %v989 = vpop.permute.xlu0 %988
        %990 = vrot.lane.b32.xlu0 %v982, 112
        %v991 = vpop.permute.xlu0 %990
        %v992 = vsel %vm282, %v987, %v989
        %v993 = vsel %vm282, %v989, %v991
        %v997 = vadd.f32 %v973, %v992
        %v998 = vadd.f32 %v974, %v993
        %v999 = vadd.f32 %v975, %v991
        %1000 = vset.pattern.permute.xlu0 18
        %1001 = vperm.xlu0 %1000, %v254
        %v1002 = vpop.permute.xlu0 %1001
        %v1004 = vmul.f32 %v1002, 0.0
        %v1005 = vmul.f32 %v225, %v1002
        %v1006 = vmul.f32 %v226, %v1002
        %1010 = vrot.lane.b32.xlu0 %v1004, 96
        %v1011 = vpop.permute.xlu0 %1010
        %1012 = vrot.lane.b32.xlu0 %v1005, 96
        %v1013 = vpop.permute.xlu0 %1012
        %1014 = vrot.lane.b32.xlu0 %v1006, 96
        %v1015 = vpop.permute.xlu0 %1014
        %v1016 = vsel %vm307, %v1011, %v1013
        %v1017 = vsel %vm307, %v1013, %v1015
        %v1021 = vadd.f32 %v997, %v1016
        %v1022 = vadd.f32 %v998, %v1017
        %v1023 = vadd.f32 %v999, %v1015
        %1024 = vset.pattern.permute.xlu0 25
        %1025 = vperm.xlu0 %1024, %v254
        %v1026 = vpop.permute.xlu0 %1025
        %v1028 = vmul.f32 %v225, %v1026
        %v1029 = vmul.f32 %v226, %v1026
        %v1030 = vmul.f32 %v1026, 0.0
        %1034 = vrot.lane.b32.xlu0 %v1028, 80
        %v1035 = vpop.permute.xlu0 %1034
        %1036 = vrot.lane.b32.xlu0 %v1029, 80
        %v1037 = vpop.permute.xlu0 %1036
        %1038 = vrot.lane.b32.xlu0 %v1030, 80
        %v1039 = vpop.permute.xlu0 %1038
        %v1040 = vsel %vm332, %v1035, %v1037
        %v1041 = vsel %vm332, %v1037, %v1039
        %v1045 = vadd.f32 %v1021, %v1035
        %v1046 = vadd.f32 %v1022, %v1040
        %v1047 = vadd.f32 %v1023, %v1041
        %1048 = vset.pattern.permute.xlu0 32
        %1049 = vperm.xlu0 %1048, %v254
        %v1050 = vpop.permute.xlu0 %1049
        %v1052 = vmul.f32 %v225, %v1050
        %v1053 = vmul.f32 %v226, %v1050
        %v1054 = vmul.f32 %v1050, 0.0
        %1058 = vrot.lane.b32.xlu0 %v1052, 64
        %v1059 = vpop.permute.xlu0 %1058
        %1060 = vrot.lane.b32.xlu0 %v1053, 64
        %v1061 = vpop.permute.xlu0 %1060
        %1062 = vrot.lane.b32.xlu0 %v1054, 64
        %v1063 = vpop.permute.xlu0 %1062
        %v1064 = vsel %vm357, %v1059, %v1061
        %v1065 = vsel %vm357, %v1061, %v1063
        %v1069 = vadd.f32 %v1045, %v1059
        %v1070 = vadd.f32 %v1046, %v1064
        %v1071 = vadd.f32 %v1047, %v1065
        %1072 = vset.pattern.permute.xlu0 39
        %1073 = vperm.xlu0 %1072, %v254
        %v1074 = vpop.permute.xlu0 %1073
        %v1076 = vmul.f32 %v225, %v1074
        %v1077 = vmul.f32 %v226, %v1074
        %v1078 = vmul.f32 %v1074, 0.0
        %1082 = vrot.lane.b32.xlu0 %v1076, 48
        %v1083 = vpop.permute.xlu0 %1082
        %1084 = vrot.lane.b32.xlu0 %v1077, 48
        %v1085 = vpop.permute.xlu0 %1084
        %1086 = vrot.lane.b32.xlu0 %v1078, 48
        %v1087 = vpop.permute.xlu0 %1086
        %v1088 = vsel %vm382, %v1083, %v1085
        %v1089 = vsel %vm382, %v1085, %v1087
        %v1093 = vadd.f32 %v1069, %v1083
        %v1094 = vadd.f32 %v1070, %v1088
        %v1095 = vadd.f32 %v1071, %v1089
        %1096 = vset.pattern.permute.xlu0 46
        %1097 = vperm.xlu0 %1096, %v254
        %v1098 = vpop.permute.xlu0 %1097
        %v1100 = vmul.f32 %v225, %v1098
        %v1101 = vmul.f32 %v226, %v1098
        %v1102 = vmul.f32 %v1098, 0.0
        %1106 = vrot.lane.b32.xlu0 %v1100, 32
        %v1107 = vpop.permute.xlu0 %1106
        %1108 = vrot.lane.b32.xlu0 %v1101, 32
        %v1109 = vpop.permute.xlu0 %1108
        %1110 = vrot.lane.b32.xlu0 %v1102, 32
        %v1111 = vpop.permute.xlu0 %1110
        %v1112 = vsel %vm407, %v1107, %v1109
        %v1113 = vsel %vm407, %v1109, %v1111
        %v1117 = vadd.f32 %v1093, %v1107
        %v1118 = vadd.f32 %v1094, %v1112
        %v1119 = vadd.f32 %v1095, %v1113
        %v1120 = vadd.s32 %v252, 1
        %v1121 = vadd.s32 %v253, 1
        %vm1122 = vcmp.ge.s32.totalorder %v1120, 0
        %vm1123 = vcmp.ge.s32.totalorder %v1121, 0
        %vm1124 = vcmp.lt.s32.totalorder %v1120, 16
        %vm1125 = vcmp.lt.s32.totalorder %v1121, 16
        %vm1126 = vmand %vm1122, %vm1124
        %vm1127 = vmand %vm1123, %vm1125
        %1131 = vrot.lane.b32.xlu0 %v1117, 47
        %v1132 = vpop.permute.xlu0 %1131
        %1133 = vrot.lane.b32.xlu0 %v1118, 47
        %v1134 = vpop.permute.xlu0 %1133
        %1135 = vrot.lane.b32.xlu0 %v1119, 47
        %v1136 = vpop.permute.xlu0 %1135
        %vm1137 = vcmask 384000
        %v1138 = vsel %vm1137, %v1132, %v1134
        %v1139 = vsel %vm1137, %v1134, %v1136
        %v1142 = vsel %vm1126, %v1138, 0.0
        %v1143 = vsel %vm1127, %v1139, 0.0
        %v1144 = vadd.f32 %v964, %v1142
        %v1145 = vadd.f32 %v965, %v1143
        %1146 = vset.pattern.permute.xlu0 5
        %1147 = vperm.xlu0 %1146, %v254
        %v1148 = vpop.permute.xlu0 %1147
        %v1150 = vmul.f32 %v1148, 0.0
        %v1151 = vmul.f32 %v225, %v1148
        %v1152 = vmul.f32 %v226, %v1148
        %v1153 = vadd.f32 %v1150, 0.0
        %v1154 = vadd.f32 %v1151, 0.0
        %v1155 = vadd.f32 %v1152, 0.0
        %1156 = vset.pattern.permute.xlu0 12
        %1157 = vperm.xlu0 %1156, %v254
        %v1158 = vpop.permute.xlu0 %1157
        %v1160 = vmul.f32 %v1158, 0.0
        %v1161 = vmul.f32 %v225, %v1158
        %v1162 = vmul.f32 %v226, %v1158
        %1166 = vrot.lane.b32.xlu0 %v1160, 112
        %v1167 = vpop.permute.xlu0 %1166
        %1168 = vrot.lane.b32.xlu0 %v1161, 112
        %v1169 = vpop.permute.xlu0 %1168
        %1170 = vrot.lane.b32.xlu0 %v1162, 112
        %v1171 = vpop.permute.xlu0 %1170
        %v1172 = vsel %vm282, %v1167, %v1169
        %v1173 = vsel %vm282, %v1169, %v1171
        %v1177 = vadd.f32 %v1153, %v1172
        %v1178 = vadd.f32 %v1154, %v1173
        %v1179 = vadd.f32 %v1155, %v1171
        %1180 = vset.pattern.permute.xlu0 19
        %1181 = vperm.xlu0 %1180, %v254
        %v1182 = vpop.permute.xlu0 %1181
        %v1184 = vmul.f32 %v1182, 0.0
        %v1185 = vmul.f32 %v225, %v1182
        %v1186 = vmul.f32 %v226, %v1182
        %1190 = vrot.lane.b32.xlu0 %v1184, 96
        %v1191 = vpop.permute.xlu0 %1190
        %1192 = vrot.lane.b32.xlu0 %v1185, 96
        %v1193 = vpop.permute.xlu0 %1192
        %1194 = vrot.lane.b32.xlu0 %v1186, 96
        %v1195 = vpop.permute.xlu0 %1194
        %v1196 = vsel %vm307, %v1191, %v1193
        %v1197 = vsel %vm307, %v1193, %v1195
        %v1201 = vadd.f32 %v1177, %v1196
        %v1202 = vadd.f32 %v1178, %v1197
        %v1203 = vadd.f32 %v1179, %v1195
        %1204 = vset.pattern.permute.xlu0 26
        %1205 = vperm.xlu0 %1204, %v254
        %v1206 = vpop.permute.xlu0 %1205
        %v1208 = vmul.f32 %v225, %v1206
        %v1209 = vmul.f32 %v226, %v1206
        %v1210 = vmul.f32 %v1206, 0.0
        %1214 = vrot.lane.b32.xlu0 %v1208, 80
        %v1215 = vpop.permute.xlu0 %1214
        %1216 = vrot.lane.b32.xlu0 %v1209, 80
        %v1217 = vpop.permute.xlu0 %1216
        %1218 = vrot.lane.b32.xlu0 %v1210, 80
        %v1219 = vpop.permute.xlu0 %1218
        %v1220 = vsel %vm332, %v1215, %v1217
        %v1221 = vsel %vm332, %v1217, %v1219
        %v1225 = vadd.f32 %v1201, %v1215
        %v1226 = vadd.f32 %v1202, %v1220
        %v1227 = vadd.f32 %v1203, %v1221
        %1228 = vset.pattern.permute.xlu0 33
        %1229 = vperm.xlu0 %1228, %v254
        %v1230 = vpop.permute.xlu0 %1229
        %v1232 = vmul.f32 %v225, %v1230
        %v1233 = vmul.f32 %v226, %v1230
        %v1234 = vmul.f32 %v1230, 0.0
        %1238 = vrot.lane.b32.xlu0 %v1232, 64
        %v1239 = vpop.permute.xlu0 %1238
        %1240 = vrot.lane.b32.xlu0 %v1233, 64
        %v1241 = vpop.permute.xlu0 %1240
        %1242 = vrot.lane.b32.xlu0 %v1234, 64
        %v1243 = vpop.permute.xlu0 %1242
        %v1244 = vsel %vm357, %v1239, %v1241
        %v1245 = vsel %vm357, %v1241, %v1243
        %v1249 = vadd.f32 %v1225, %v1239
        %v1250 = vadd.f32 %v1226, %v1244
        %v1251 = vadd.f32 %v1227, %v1245
        %1252 = vset.pattern.permute.xlu0 40
        %1253 = vperm.xlu0 %1252, %v254
        %v1254 = vpop.permute.xlu0 %1253
        %v1256 = vmul.f32 %v225, %v1254
        %v1257 = vmul.f32 %v226, %v1254
        %v1258 = vmul.f32 %v1254, 0.0
        %1262 = vrot.lane.b32.xlu0 %v1256, 48
        %v1263 = vpop.permute.xlu0 %1262
        %1264 = vrot.lane.b32.xlu0 %v1257, 48
        %v1265 = vpop.permute.xlu0 %1264
        %1266 = vrot.lane.b32.xlu0 %v1258, 48
        %v1267 = vpop.permute.xlu0 %1266
        %v1268 = vsel %vm382, %v1263, %v1265
        %v1269 = vsel %vm382, %v1265, %v1267
        %v1273 = vadd.f32 %v1249, %v1263
        %v1274 = vadd.f32 %v1250, %v1268
        %v1275 = vadd.f32 %v1251, %v1269
        %1276 = vset.pattern.permute.xlu0 47
        %1277 = vperm.xlu0 %1276, %v254
        %v1278 = vpop.permute.xlu0 %1277
        %v1280 = vmul.f32 %v225, %v1278
        %v1281 = vmul.f32 %v226, %v1278
        %v1282 = vmul.f32 %v1278, 0.0
        %1286 = vrot.lane.b32.xlu0 %v1280, 32
        %v1287 = vpop.permute.xlu0 %1286
        %1288 = vrot.lane.b32.xlu0 %v1281, 32
        %v1289 = vpop.permute.xlu0 %1288
        %1290 = vrot.lane.b32.xlu0 %v1282, 32
        %v1291 = vpop.permute.xlu0 %1290
        %v1292 = vsel %vm407, %v1287, %v1289
        %v1293 = vsel %vm407, %v1289, %v1291
        %v1297 = vadd.f32 %v1273, %v1287
        %v1298 = vadd.f32 %v1274, %v1292
        %v1299 = vadd.f32 %v1275, %v1293
        %v1300 = vadd.s32 %v252, 2
        %v1301 = vadd.s32 %v253, 2
        %vm1302 = vcmp.ge.s32.totalorder %v1300, 0
        %vm1303 = vcmp.ge.s32.totalorder %v1301, 0
        %vm1304 = vcmp.lt.s32.totalorder %v1300, 16
        %vm1305 = vcmp.lt.s32.totalorder %v1301, 16
        %vm1306 = vmand %vm1302, %vm1304
        %vm1307 = vmand %vm1303, %vm1305
        %1311 = vrot.lane.b32.xlu0 %v1297, 46
        %v1312 = vpop.permute.xlu0 %1311
        %1313 = vrot.lane.b32.xlu0 %v1298, 46
        %v1314 = vpop.permute.xlu0 %1313
        %1315 = vrot.lane.b32.xlu0 %v1299, 46
        %v1316 = vpop.permute.xlu0 %1315
        %vm1317 = vcmask 375808
        %v1318 = vsel %vm1317, %v1312, %v1314
        %v1319 = vsel %vm1317, %v1314, %v1316
        %v1322 = vsel %vm1306, %v1318, 0.0
        %v1323 = vsel %vm1307, %v1319, 0.0
        %v1324 = vadd.f32 %v1144, %v1322
        %v1325 = vadd.f32 %v1145, %v1323
        %1326 = vset.pattern.permute.xlu0 6
        %1327 = vperm.xlu0 %1326, %v254
        %v1328 = vpop.permute.xlu0 %1327
        %v1330 = vmul.f32 %v1328, 0.0
        %v1331 = vmul.f32 %v225, %v1328
        %v1332 = vmul.f32 %v226, %v1328
        %v1333 = vadd.f32 %v1330, 0.0
        %v1334 = vadd.f32 %v1331, 0.0
        %v1335 = vadd.f32 %v1332, 0.0
        %1336 = vset.pattern.permute.xlu0 13
        %1337 = vperm.xlu0 %1336, %v254
        %v1338 = vpop.permute.xlu0 %1337
        %v1340 = vmul.f32 %v1338, 0.0
        %v1341 = vmul.f32 %v225, %v1338
        %v1342 = vmul.f32 %v226, %v1338
        %1346 = vrot.lane.b32.xlu0 %v1340, 112
        %v1347 = vpop.permute.xlu0 %1346
        %1348 = vrot.lane.b32.xlu0 %v1341, 112
        %v1349 = vpop.permute.xlu0 %1348
        %1350 = vrot.lane.b32.xlu0 %v1342, 112
        %v1351 = vpop.permute.xlu0 %1350
        %v1352 = vsel %vm282, %v1347, %v1349
        %v1353 = vsel %vm282, %v1349, %v1351
        %v1357 = vadd.f32 %v1333, %v1352
        %v1358 = vadd.f32 %v1334, %v1353
        %v1359 = vadd.f32 %v1335, %v1351
        %1360 = vset.pattern.permute.xlu0 20
        %1361 = vperm.xlu0 %1360, %v254
        %v1362 = vpop.permute.xlu0 %1361
        %v1364 = vmul.f32 %v1362, 0.0
        %v1365 = vmul.f32 %v225, %v1362
        %v1366 = vmul.f32 %v226, %v1362
        %1370 = vrot.lane.b32.xlu0 %v1364, 96
        %v1371 = vpop.permute.xlu0 %1370
        %1372 = vrot.lane.b32.xlu0 %v1365, 96
        %v1373 = vpop.permute.xlu0 %1372
        %1374 = vrot.lane.b32.xlu0 %v1366, 96
        %v1375 = vpop.permute.xlu0 %1374
        %v1376 = vsel %vm307, %v1371, %v1373
        %v1377 = vsel %vm307, %v1373, %v1375
        %v1381 = vadd.f32 %v1357, %v1376
        %v1382 = vadd.f32 %v1358, %v1377
        %v1383 = vadd.f32 %v1359, %v1375
        %1384 = vset.pattern.permute.xlu0 27
        %1385 = vperm.xlu0 %1384, %v254
        %v1386 = vpop.permute.xlu0 %1385
        %v1388 = vmul.f32 %v225, %v1386
        %v1389 = vmul.f32 %v226, %v1386
        %v1390 = vmul.f32 %v1386, 0.0
        %1394 = vrot.lane.b32.xlu0 %v1388, 80
        %v1395 = vpop.permute.xlu0 %1394
        %1396 = vrot.lane.b32.xlu0 %v1389, 80
        %v1397 = vpop.permute.xlu0 %1396
        %1398 = vrot.lane.b32.xlu0 %v1390, 80
        %v1399 = vpop.permute.xlu0 %1398
        %v1400 = vsel %vm332, %v1395, %v1397
        %v1401 = vsel %vm332, %v1397, %v1399
        %v1405 = vadd.f32 %v1381, %v1395
        %v1406 = vadd.f32 %v1382, %v1400
        %v1407 = vadd.f32 %v1383, %v1401
        %1408 = vset.pattern.permute.xlu0 34
        %1409 = vperm.xlu0 %1408, %v254
        %v1410 = vpop.permute.xlu0 %1409
        %v1412 = vmul.f32 %v225, %v1410
        %v1413 = vmul.f32 %v226, %v1410
        %v1414 = vmul.f32 %v1410, 0.0
        %1418 = vrot.lane.b32.xlu0 %v1412, 64
        %v1419 = vpop.permute.xlu0 %1418
        %1420 = vrot.lane.b32.xlu0 %v1413, 64
        %v1421 = vpop.permute.xlu0 %1420
        %1422 = vrot.lane.b32.xlu0 %v1414, 64
        %v1423 = vpop.permute.xlu0 %1422
        %v1424 = vsel %vm357, %v1419, %v1421
        %v1425 = vsel %vm357, %v1421, %v1423
        %v1429 = vadd.f32 %v1405, %v1419
        %v1430 = vadd.f32 %v1406, %v1424
        %v1431 = vadd.f32 %v1407, %v1425
        %1432 = vset.pattern.permute.xlu0 41
        %1433 = vperm.xlu0 %1432, %v254
        %v1434 = vpop.permute.xlu0 %1433
        %v1436 = vmul.f32 %v225, %v1434
        %v1437 = vmul.f32 %v226, %v1434
        %v1438 = vmul.f32 %v1434, 0.0
        %1442 = vrot.lane.b32.xlu0 %v1436, 48
        %v1443 = vpop.permute.xlu0 %1442
        %1444 = vrot.lane.b32.xlu0 %v1437, 48
        %v1445 = vpop.permute.xlu0 %1444
        %1446 = vrot.lane.b32.xlu0 %v1438, 48
        %v1447 = vpop.permute.xlu0 %1446
        %v1448 = vsel %vm382, %v1443, %v1445
        %v1449 = vsel %vm382, %v1445, %v1447
        %v1453 = vadd.f32 %v1429, %v1443
        %v1454 = vadd.f32 %v1430, %v1448
        %v1455 = vadd.f32 %v1431, %v1449
        %1456 = vset.pattern.permute.xlu0 48
        %1457 = vperm.xlu0 %1456, %v254
        %v1458 = vpop.permute.xlu0 %1457
        %v1460 = vmul.f32 %v225, %v1458
        %v1461 = vmul.f32 %v226, %v1458
        %v1462 = vmul.f32 %v1458, 0.0
        %1466 = vrot.lane.b32.xlu0 %v1460, 32
        %v1467 = vpop.permute.xlu0 %1466
        %1468 = vrot.lane.b32.xlu0 %v1461, 32
        %v1469 = vpop.permute.xlu0 %1468
        %1470 = vrot.lane.b32.xlu0 %v1462, 32
        %v1471 = vpop.permute.xlu0 %1470
        %v1472 = vsel %vm407, %v1467, %v1469
        %v1473 = vsel %vm407, %v1469, %v1471
        %v1477 = vadd.f32 %v1453, %v1467
        %v1478 = vadd.f32 %v1454, %v1472
        %v1479 = vadd.f32 %v1455, %v1473
        %v1480 = vadd.s32 %v252, 3
        %v1481 = vadd.s32 %v253, 3
        %vm1482 = vcmp.ge.s32.totalorder %v1480, 0
        %vm1483 = vcmp.ge.s32.totalorder %v1481, 0
        %vm1484 = vcmp.lt.s32.totalorder %v1480, 16
        %vm1485 = vcmp.lt.s32.totalorder %v1481, 16
        %vm1486 = vmand %vm1482, %vm1484
        %vm1487 = vmand %vm1483, %vm1485
        %1491 = vrot.lane.b32.xlu0 %v1477, 45
        %v1492 = vpop.permute.xlu0 %1491
        %1493 = vrot.lane.b32.xlu0 %v1478, 45
        %v1494 = vpop.permute.xlu0 %1493
        %1495 = vrot.lane.b32.xlu0 %v1479, 45
        %v1496 = vpop.permute.xlu0 %1495
        %vm1497 = vcmask 367616
        %v1498 = vsel %vm1497, %v1492, %v1494
        %v1499 = vsel %vm1497, %v1494, %v1496
        %v1502 = vsel %vm1486, %v1498, 0.0
        %v1503 = vsel %vm1487, %v1499, 0.0
        %v1504 = vadd.f32 %v1324, %v1502
        %v1505 = vadd.f32 %v1325, %v1503
        %v1508 = vrot.slane %v1504, 1
        %v1509 = vrot.slane %v1505, 1
        %v1512 = vadd.f32 %v1504, %v1508
        %v1513 = vadd.f32 %v1505, %v1509
        %s1514 = sld [smem:[#allocation2]]
        %v1515 = vstv %s1514
        %v1516 = vadd.f32 %v1512, %v1515
        %v1517 = vadd.f32 %v1513, %v1515
        %v1518 = vxor.u32 %v1516, 2147483648
        %v1519 = vxor.u32 %v1517, 2147483648
        %v1520 = vmul.f32 %v1518, 1.442695
        %v1521 = vpow.pop %v1520
        %v1522 = vmul.f32 %v1519, 1.442695
        %v1523 = vpow.pop %v1522
        %v1524 = vadd.f32 %v1521, 1.0
        %v1525 = vadd.f32 %v1523, 1.0
        %v1526 = vrcp.pop %v1524
        %v1527 = vmul.f32 1.0, %v1526
        %v1528 = vrcp.pop %v1525
        %v1529 = vmul.f32 1.0, %v1528
        %v1530 = vlaneseq
        %v1531 = vshrl.u32 %v1530, 7
        %v1532 = vsub.s32 0, %v1531
        %v1533 = vrot.slane %v1527, %v1532
        %v1534 = vlaneseq
        %v1535 = vshrl.u32 %v1534, 7
        %v1536 = vsub.s32 0, %v1535
        %v1537 = vrot.slane %v1529, %v1536
        %v1540 = vcombine.low %v1533, %v1537
        %v1542 = vmul.f32 %v188, %v1540
        %1543 = vst [vmem:[%s187] sm:$0xff] %v1542
        %s1544 = sand.u32 %s97, 1
        %s1545 = scalar_lea.sflag [#allocation5], %s1544
        %s1546 = sand.u32 %s97, 1
        %s1547 = smul.addr %s1546, 8
        %s1548 = scalar_lea.vmem [#allocation6], %s1547
        // Predicated region
        $region37: #{tpu_custom_call.1} parent=31 // pred_check
          %p1549 = pneg %p107
        $region38: #{tpu_custom_call.1} parent=31 // pred_check_branch
          %1551 = sbr.rel (%p1549) target = $region40
        $region39: #{tpu_custom_call.1} parent=31 // pred_region
          %s1553 = ssub.s32 128, 128
          %1554 = vsyncadd %s1545, %s1553
          %s1555 = smul.addr %s21, 2
          %s1556 = smul.addr %s1555, 64
          %s1557 = scalar_lea.hbm %s3, %s1556
          %s1559 = sshll.u32 %s1548, 4
          %s1560 = int_to_ptr.vmem [resolvable:$true] %s1559
          %1562 = dma.vmem_to_hbm [thread:$0]  %s1560, 128, %s1557, %s1545
        $region40: #{tpu_custom_call.1} parent=31 // pred_fallthru
          _
      $region32: #{tpu_custom_call.1} parent=5 // pred_fallthru
        _
      %p1563 = scmp.le.s32.totalorder 2, %s16
      // Predicated region
      $region41: #{tpu_custom_call.1} parent=5 // pred_check
        %p1564 = pneg %p1563
      $region42: #{tpu_custom_call.1} parent=5 // pred_check_branch
        %1566 = sbr.rel (%p1564) target = $region44
      $region43: #{tpu_custom_call.1} parent=5 // pred_region
        %s1567 = ssub.s32 %s16, 2
        // Predicated region
        $region45: #{tpu_custom_call.1} parent=43 // pred_check
          %p1568 = pneg %p113
        $region46: #{tpu_custom_call.1} parent=43 // pred_check_branch
          %1570 = sbr.rel (%p1568) target = $region48
        $region47: #{tpu_custom_call.1} parent=43 // pred_region
          %s1571 = sand.u32 %s98, 1
          %s1572 = scalar_lea.sflag [#allocation5], %s1571
          %s1573 = sand.u32 %s98, 1
          %s1574 = smul.addr %s1573, 8
          %s1575 = scalar_lea.vmem [#allocation6], %s1574
          %1576 = dma.done %s1572, 128
        $region48: #{tpu_custom_call.1} parent=43 // pred_fallthru
          _
      $region44: #{tpu_custom_call.1} parent=5 // pred_fallthru
        _
    $region6: #{tpu_custom_call.1} parent=1 // loop_footer
      %s20 = sadd.s32 1, %s16
    $region7: #{tpu_custom_call.1} parent=1 // loop_footer_branch
      %15 = sbr.rel target = $region3
    $region8: #{tpu_custom_call.1} parent=1 // loop_exit
      _
    %1577 = vsyncpa [#allocation4], 1
    %s1578 = scalar_lea.sflag [#allocation4], 1
    %1579 = vsyncpa %s1578, 1
    %1580 = vsyncpa [#allocation5], 1
    %s1581 = scalar_lea.sflag [#allocation5], 1
    %1582 = vsyncpa %s1581, 1

</llo_original>
